<compile_context>
chip_gen: v7x
topology: tpu7x:2x2x1
jax: 0.10.0
libtpu: 0.0.40
codegen_flags: <defaults>
</compile_context>

<pallas_src>
import functools

import jax
import jax.numpy as jnp
from jax import lax
from jax.experimental import pallas as pl
from jax.experimental.pallas import tpu as pltpu


# ----------------------------------------------------------------------------
# Fused kernel: relu(q/k/v) -> batched attention -> torch .view -> Linear
#               -> ReLU -> dropout (int8 keep-mask), one batch block per step.
# ----------------------------------------------------------------------------
def _mhsa_ffn_kernel(q_ref, k_ref, v_ref, wt_ref, b_ref, mask_ref, o_ref, *,
                     num_heads, drop_scale):
    Bb, T, Fq = q_ref.shape
    _, _, Fk = k_ref.shape
    _, _, Fv = v_ref.shape
    Dm = wt_ref.shape[0]
    H = num_heads
    dq, dk, dv = Fq // H, Fk // H, Fv // H

    # ReLU; 1/sqrt(dq) folded into q (torch divides the scores by sqrt(fq // H)).
    scale = 1.0 / (float(dq) ** 0.5)
    qs = jnp.maximum(q_ref[...], 0.0) * scale          # (Bb, T, Fq)
    ks = jnp.maximum(k_ref[...], 0.0)                  # (Bb, T, Fk)
    vs = jnp.maximum(v_ref[...], 0.0)                  # (Bb, T, Fv)

    # Attention per head; each contraction carries the WHOLE batch block as the einsum batch dim,
    # so step overhead is amortized even though heads are statically unrolled (H is small).
    o_heads = []
    for h in range(H):
        qh = qs[:, :, h * dq:(h + 1) * dq]             # (Bb, T, dq)  static lane slice
        kh = ks[:, :, h * dk:(h + 1) * dk]
        vh = vs[:, :, h * dv:(h + 1) * dv]
        s = jnp.einsum('btd,bsd->bts', qh, kh,
                       preferred_element_type=jnp.float32)          # (Bb, T, T)
        s = s - jnp.max(s, axis=-1, keepdims=True)
        e = jnp.exp(s)
        att = e / jnp.sum(e, axis=-1, keepdims=True)   # exact divide (torch parity)
        o_heads.append(jnp.einsum('bts,bsd->btd', att, vh,
                                  preferred_element_type=jnp.float32))   # (Bb, T, dv)

    # Context rows in (h, t) order per batch element: the flat stream torch's .view re-chunks.
    o_rows = jnp.concatenate(o_heads, axis=1)          # (Bb, H*T, dv)

    # torch: output.view(bs, ts, -1) on the contiguous (b, h, t, f) tensor.  Per batch the flat
    # (h, t, f) stream is re-chunked into T rows of Dm = H*dv:
    #     y[b, r, m*dv + f] = o_rows[b, r*H + m, f]        (m = 0..H-1)
    # Implemented as constant 0/1 selection matmuls + lane concat (keeps the permutation on the
    # MXU instead of relying on general reshapes/transposes).
    row_r = lax.broadcasted_iota(jnp.int32, (T, H * T), 0)
    col_u = lax.broadcasted_iota(jnp.int32, (T, H * T), 1)
    pieces = []
    for m in range(H):
        sel = (col_u == row_r * H + m).astype(jnp.float32)           # (T, H*T) 0/1
        sel_b = jnp.broadcast_to(sel[None], (Bb, T, H * T))
        pieces.append(jnp.einsum('bru,bud->brd', sel_b, o_rows,
                                 preferred_element_type=jnp.float32))   # (Bb, T, dv)
    y = jnp.concatenate(pieces, axis=-1)               # (Bb, T, Dm)  == torch's viewed tensor
    y2 = y.reshape(Bb * T, Dm)                         # fold batch into the MXU M dim (T = 8-aligned)

    # FFN (single fat matmul over all rows of the block) + ReLU + dropout.
    z = jnp.dot(y2, wt_ref[...], preferred_element_type=jnp.float32) + b_ref[...]
    z = jnp.maximum(z, 0.0)
    z = z * (mask_ref[...].astype(jnp.float32) * drop_scale)   # int8 keep-mask, scale folded in
    o_ref[...] = z.astype(o_ref.dtype)                 # (Bb*T, Dm)


def _pick_batch_block(batch, cap=256):
    """Largest batch block <= cap that divides the batch (fat steps, VMEM never binds here)."""
    if batch <= cap:
        return batch
    for bb in range(cap, 0, -1):
        if batch % bb == 0:
            return bb
    return batch


def fused_mhsa_small(q, k, v, wt, bias, mask_i8, num_heads, drop_scale):
    B, T, Fq = q.shape
    _, _, Fk = k.shape
    _, _, Fv = v.shape
    Dm = wt.shape[0]
    Bb = _pick_batch_block(B)
    num_blocks = B // Bb

    kernel = functools.partial(_mhsa_ffn_kernel, num_heads=num_heads, drop_scale=drop_scale)
    out = pl.pallas_call(
        kernel,
        out_shape=jax.ShapeDtypeStruct((B * T, Dm), jnp.float32),
        grid=(num_blocks,),
        in_specs=[
            pl.BlockSpec((Bb, T, Fq), lambda i: (i, 0, 0)),
            pl.BlockSpec((Bb, T, Fk), lambda i: (i, 0, 0)),
            pl.BlockSpec((Bb, T, Fv), lambda i: (i, 0, 0)),
            pl.BlockSpec((Dm, Dm), lambda i: (0, 0)),          # W.T, resident across steps
            pl.BlockSpec((1, Dm), lambda i: (0, 0)),           # bias, resident
            pl.BlockSpec((Bb * T, Dm), lambda i: (i, 0)),      # int8 keep-mask
        ],
        out_specs=pl.BlockSpec((Bb * T, Dm), lambda i: (i, 0)),
        compiler_params=pltpu.CompilerParams(dimension_semantics=("parallel",)),
    )(q, k, v, wt, bias, mask_i8)
    return out


# ----------------------------------------------------------------------------
# Module wrapper
# ----------------------------------------------------------------------------
class MultiHeadAttentionSmallPallas:
    def __init__(self, num_heads, dim_m, dropout, key):
        assert dim_m % num_heads == 0
        self.num_heads = num_heads
        self.dim_m = dim_m
        self.dropout = float(dropout)
        kw, kb = jax.random.split(key)
        bound = 1.0 / (dim_m ** 0.5)                    # torch nn.Linear default init
        w = jax.random.uniform(kw, (dim_m, dim_m), jnp.float32, -bound, bound)
        self.wt = jnp.transpose(w)                      # pre-transposed once (torch: y @ W.T + b)
        self.bias = jax.random.uniform(kb, (dim_m,), jnp.float32, -bound, bound).reshape(1, dim_m)

    def __call__(self, q, k, v, *, dropout_key=None, training=True):
        B, T, Fq = q.shape
        _, _, Fk = k.shape
        _, _, Fv = v.shape
        H, Dm = self.num_heads, self.dim_m
        assert Fq % H == 0 and Fk % H == 0 and Fv % H == 0
        assert Fv == Dm, "torch's view + Linear(dim_m, dim_m) requires fv == dim_m"

        if training and self.dropout > 0.0:
            assert dropout_key is not None
            # TODO(synk): RNG stream differs from torch's nn.Dropout (same distribution only).
            keep = jax.random.bernoulli(dropout_key, 1.0 - self.dropout, (B * T, Dm))
            mask_i8 = keep.astype(jnp.int8)
            drop_scale = 1.0 / (1.0 - self.dropout)
        else:
            mask_i8 = jnp.ones((B * T, Dm), jnp.int8)   # eval mode: dropout is a no-op
            drop_scale = 1.0

        out = fused_mhsa_small(q, k, v, self.wt, self.bias, mask_i8, H, drop_scale)  # (B*T, Dm)
        return out.reshape(B, T, Dm)                    # free C-order reinterpretation

    # Pure-JAX reference (mirrors the torch forward) for correctness checking.
    def reference(self, q, k, v, keep_mask=None):
        B, T, Fq = q.shape
        H = self.num_heads
        dq = Fq // H
        qs = jnp.maximum(q.reshape(B, T, H, dq), 0.0)
        ks = jnp.maximum(k.reshape(B, T, H, k.shape[-1] // H), 0.0)
        vs = jnp.maximum(v.reshape(B, T, H, v.shape[-1] // H), 0.0)
        att = jnp.einsum('bthf,byhf->bhty', qs, ks) / (dq ** 0.5)
        att = jax.nn.softmax(att, axis=-1)
        out = jnp.einsum('bhty,byhf->bhtf', att, vs).reshape(B, T, -1)   # torch's raw .view
        z = jnp.maximum(out @ self.wt + self.bias, 0.0)
        if keep_mask is not None:
            z = z * keep_mask
        return z


if __name__ == "__main__":
    B, T, H, dim_m = 2, 8, 4, 32          # fq = fk = fv = dim_m = 32, head dim = 8
    key = jax.random.PRNGKey(0)
    kq, kk, kv, kp, kd = jax.random.split(key, 5)
    q = jax.random.normal(kq, (B, T, dim_m), jnp.float32)
    k = jax.random.normal(kk, (B, T, dim_m), jnp.float32)
    v = jax.random.normal(kv, (B, T, dim_m), jnp.float32)

    mod = MultiHeadAttentionSmallPallas(num_heads=H, dim_m=dim_m, dropout=0.1, key=kp)

    # Training mode (dropout active, mask shared with the reference).
    out = mod(q, k, v, dropout_key=kd, training=True)
    out = jax.block_until_ready(out)
    assert out.shape == (B, T, dim_m)

    keep = jax.random.bernoulli(kd, 1.0 - mod.dropout, (B * T, dim_m))
    keep_mask = (keep.astype(jnp.float32) * (1.0 / (1.0 - mod.dropout))).reshape(B, T, dim_m)
    ref = mod.reference(q, k, v, keep_mask)
    assert jnp.allclose(out, ref, rtol=1e-5, atol=1e-5), "mismatch vs reference (train)"

    # Eval mode (dropout is a no-op).
    out_eval = jax.block_until_ready(mod(q, k, v, training=False))
    ref_eval = mod.reference(q, k, v, None)
    assert jnp.allclose(out_eval, ref_eval, rtol=1e-5, atol=1e-5), "mismatch vs reference (eval)"

    print("KERNEL_OK")
</pallas_src>

<mosaic_0001>
module attributes {stable_mosaic.version = 11 : i64} {
  func.func @_mhsa_ffn_kernel(%arg0: i32, %arg1: memref<2x8x32xf32, #tpu.memory_space<vmem>>, %arg2: memref<2x8x32xf32, #tpu.memory_space<vmem>>, %arg3: memref<2x8x32xf32, #tpu.memory_space<vmem>>, %arg4: memref<32x32xf32, #tpu.memory_space<vmem>>, %arg5: memref<1x32xf32, #tpu.memory_space<vmem>>, %arg6: memref<16x32xi8, #tpu.memory_space<vmem>>, %arg7: memref<16x32xf32, #tpu.memory_space<vmem>>) attributes {dimension_semantics = [#tpu.dimension_semantics<parallel>], iteration_bounds = array<i64: 1>, scalar_prefetch = 0 : i64, scratch_operands = 0 : i64, tpu.core_type = #tpu.core_type<tc>, window_params = [{transform_indices = @transform_0, window_bounds = array<i64: 2, 8, 32>}, {transform_indices = @transform_1, window_bounds = array<i64: 2, 8, 32>}, {transform_indices = @transform_2, window_bounds = array<i64: 2, 8, 32>}, {pipeline_mode = #tpu.pipeline_mode<synchronous>, transform_indices = @transform_3, window_bounds = array<i64: 32, 32>}, {pipeline_mode = #tpu.pipeline_mode<synchronous>, transform_indices = @transform_4, window_bounds = array<i64: 1, 32>}, {transform_indices = @transform_5, window_bounds = array<i64: 16, 32>}, {transform_indices = @transform_6, window_bounds = array<i64: 16, 32>}]} {
    %c0 = arith.constant 0 : index
    %c0_0 = arith.constant 0 : index
    %c0_1 = arith.constant 0 : index
    %0 = vector.load %arg1[%c0, %c0_0, %c0_1] : memref<2x8x32xf32, #tpu.memory_space<vmem>>, vector<2x8x32xf32>
    %cst = arith.constant 0.000000e+00 : f32
    %1 = vector.broadcast %cst : f32 to vector<2x8x32xf32>
    %2 = arith.maximumf %0, %1 : vector<2x8x32xf32>
    %cst_2 = arith.constant 0.353553385 : f32
    %3 = vector.broadcast %cst_2 : f32 to vector<2x8x32xf32>
    %4 = arith.mulf %2, %3 : vector<2x8x32xf32>
    %c0_3 = arith.constant 0 : index
    %c0_4 = arith.constant 0 : index
    %c0_5 = arith.constant 0 : index
    %5 = vector.load %arg2[%c0_3, %c0_4, %c0_5] : memref<2x8x32xf32, #tpu.memory_space<vmem>>, vector<2x8x32xf32>
    %cst_6 = arith.constant 0.000000e+00 : f32
    %6 = vector.broadcast %cst_6 : f32 to vector<2x8x32xf32>
    %7 = arith.maximumf %5, %6 : vector<2x8x32xf32>
    %c0_7 = arith.constant 0 : index
    %c0_8 = arith.constant 0 : index
    %c0_9 = arith.constant 0 : index
    %8 = vector.load %arg3[%c0_7, %c0_8, %c0_9] : memref<2x8x32xf32, #tpu.memory_space<vmem>>, vector<2x8x32xf32>
    %cst_10 = arith.constant 0.000000e+00 : f32
    %9 = vector.broadcast %cst_10 : f32 to vector<2x8x32xf32>
    %10 = arith.maximumf %8, %9 : vector<2x8x32xf32>
    %11 = vector.extract_strided_slice %4 {offsets = [0, 0, 0], sizes = [2, 8, 8], strides = [1, 1, 1]} : vector<2x8x32xf32> to vector<2x8x8xf32>
    %12 = vector.extract_strided_slice %7 {offsets = [0, 0, 0], sizes = [2, 8, 8], strides = [1, 1, 1]} : vector<2x8x32xf32> to vector<2x8x8xf32>
    %13 = vector.extract_strided_slice %10 {offsets = [0, 0, 0], sizes = [2, 8, 8], strides = [1, 1, 1]} : vector<2x8x32xf32> to vector<2x8x8xf32>
    "tpu.trace_start"() <{level = 10 : i32, message = "btd,bsd->bts"}> : () -> ()
    %cst_11 = arith.constant dense<0.000000e+00> : vector<2x8x8xf32>
    %14 = tpu.matmul %11, %12, %cst_11 {dimension_numbers = #tpu.dot_dimension_numbers<[2], [2], [1], [1], [0, 0, 0, 1, 1, 1], [0], [0]>} : vector<2x8x8xf32>, vector<2x8x8xf32>, vector<2x8x8xf32> -> vector<2x8x8xf32>
    "tpu.trace_stop"() : () -> ()
    %cst_12 = arith.constant dense<0xFF800000> : vector<2x8xf32>
    %15 = vector.multi_reduction <maximumf>, %14, %cst_12 [2] : vector<2x8x8xf32> to vector<2x8xf32>
    %16 = vector.shape_cast %15 : vector<2x8xf32> to vector<2x8x1xf32>
    %17 = vector.broadcast %16 : vector<2x8x1xf32> to vector<2x8x8xf32>
    %18 = arith.subf %14, %17 : vector<2x8x8xf32>
    %19 = math.exp %18 : vector<2x8x8xf32>
    %cst_13 = arith.constant dense<0.000000e+00> : vector<2x8xf32>
    %20 = vector.multi_reduction <add>, %19, %cst_13 [2] : vector<2x8x8xf32> to vector<2x8xf32>
    %21 = vector.shape_cast %20 : vector<2x8xf32> to vector<2x8x1xf32>
    %22 = vector.broadcast %21 : vector<2x8x1xf32> to vector<2x8x8xf32>
    %23 = arith.divf %19, %22 : vector<2x8x8xf32>
    "tpu.trace_start"() <{level = 10 : i32, message = "bts,bsd->btd"}> : () -> ()
    %cst_14 = arith.constant dense<0.000000e+00> : vector<2x8x8xf32>
    %24 = tpu.matmul %23, %13, %cst_14 {dimension_numbers = #tpu.dot_dimension_numbers<[2], [1], [1], [2], [0, 0, 0, 1, 1, 2], [0], [0]>} : vector<2x8x8xf32>, vector<2x8x8xf32>, vector<2x8x8xf32> -> vector<2x8x8xf32>
    "tpu.trace_stop"() : () -> ()
    %25 = vector.extract_strided_slice %4 {offsets = [0, 0, 8], sizes = [2, 8, 8], strides = [1, 1, 1]} : vector<2x8x32xf32> to vector<2x8x8xf32>
    %26 = vector.extract_strided_slice %7 {offsets = [0, 0, 8], sizes = [2, 8, 8], strides = [1, 1, 1]} : vector<2x8x32xf32> to vector<2x8x8xf32>
    %27 = vector.extract_strided_slice %10 {offsets = [0, 0, 8], sizes = [2, 8, 8], strides = [1, 1, 1]} : vector<2x8x32xf32> to vector<2x8x8xf32>
    "tpu.trace_start"() <{level = 10 : i32, message = "btd,bsd->bts"}> : () -> ()
    %cst_15 = arith.constant dense<0.000000e+00> : vector<2x8x8xf32>
    %28 = tpu.matmul %25, %26, %cst_15 {dimension_numbers = #tpu.dot_dimension_numbers<[2], [2], [1], [1], [0, 0, 0, 1, 1, 1], [0], [0]>} : vector<2x8x8xf32>, vector<2x8x8xf32>, vector<2x8x8xf32> -> vector<2x8x8xf32>
    "tpu.trace_stop"() : () -> ()
    %cst_16 = arith.constant dense<0xFF800000> : vector<2x8xf32>
    %29 = vector.multi_reduction <maximumf>, %28, %cst_16 [2] : vector<2x8x8xf32> to vector<2x8xf32>
    %30 = vector.shape_cast %29 : vector<2x8xf32> to vector<2x8x1xf32>
    %31 = vector.broadcast %30 : vector<2x8x1xf32> to vector<2x8x8xf32>
    %32 = arith.subf %28, %31 : vector<2x8x8xf32>
    %33 = math.exp %32 : vector<2x8x8xf32>
    %cst_17 = arith.constant dense<0.000000e+00> : vector<2x8xf32>
    %34 = vector.multi_reduction <add>, %33, %cst_17 [2] : vector<2x8x8xf32> to vector<2x8xf32>
    %35 = vector.shape_cast %34 : vector<2x8xf32> to vector<2x8x1xf32>
    %36 = vector.broadcast %35 : vector<2x8x1xf32> to vector<2x8x8xf32>
    %37 = arith.divf %33, %36 : vector<2x8x8xf32>
    "tpu.trace_start"() <{level = 10 : i32, message = "bts,bsd->btd"}> : () -> ()
    %cst_18 = arith.constant dense<0.000000e+00> : vector<2x8x8xf32>
    %38 = tpu.matmul %37, %27, %cst_18 {dimension_numbers = #tpu.dot_dimension_numbers<[2], [1], [1], [2], [0, 0, 0, 1, 1, 2], [0], [0]>} : vector<2x8x8xf32>, vector<2x8x8xf32>, vector<2x8x8xf32> -> vector<2x8x8xf32>
    "tpu.trace_stop"() : () -> ()
    %39 = vector.extract_strided_slice %4 {offsets = [0, 0, 16], sizes = [2, 8, 8], strides = [1, 1, 1]} : vector<2x8x32xf32> to vector<2x8x8xf32>
    %40 = vector.extract_strided_slice %7 {offsets = [0, 0, 16], sizes = [2, 8, 8], strides = [1, 1, 1]} : vector<2x8x32xf32> to vector<2x8x8xf32>
    %41 = vector.extract_strided_slice %10 {offsets = [0, 0, 16], sizes = [2, 8, 8], strides = [1, 1, 1]} : vector<2x8x32xf32> to vector<2x8x8xf32>
    "tpu.trace_start"() <{level = 10 : i32, message = "btd,bsd->bts"}> : () -> ()
    %cst_19 = arith.constant dense<0.000000e+00> : vector<2x8x8xf32>
    %42 = tpu.matmul %39, %40, %cst_19 {dimension_numbers = #tpu.dot_dimension_numbers<[2], [2], [1], [1], [0, 0, 0, 1, 1, 1], [0], [0]>} : vector<2x8x8xf32>, vector<2x8x8xf32>, vector<2x8x8xf32> -> vector<2x8x8xf32>
    "tpu.trace_stop"() : () -> ()
    %cst_20 = arith.constant dense<0xFF800000> : vector<2x8xf32>
    %43 = vector.multi_reduction <maximumf>, %42, %cst_20 [2] : vector<2x8x8xf32> to vector<2x8xf32>
    %44 = vector.shape_cast %43 : vector<2x8xf32> to vector<2x8x1xf32>
    %45 = vector.broadcast %44 : vector<2x8x1xf32> to vector<2x8x8xf32>
    %46 = arith.subf %42, %45 : vector<2x8x8xf32>
    %47 = math.exp %46 : vector<2x8x8xf32>
    %cst_21 = arith.constant dense<0.000000e+00> : vector<2x8xf32>
    %48 = vector.multi_reduction <add>, %47, %cst_21 [2] : vector<2x8x8xf32> to vector<2x8xf32>
    %49 = vector.shape_cast %48 : vector<2x8xf32> to vector<2x8x1xf32>
    %50 = vector.broadcast %49 : vector<2x8x1xf32> to vector<2x8x8xf32>
    %51 = arith.divf %47, %50 : vector<2x8x8xf32>
    "tpu.trace_start"() <{level = 10 : i32, message = "bts,bsd->btd"}> : () -> ()
    %cst_22 = arith.constant dense<0.000000e+00> : vector<2x8x8xf32>
    %52 = tpu.matmul %51, %41, %cst_22 {dimension_numbers = #tpu.dot_dimension_numbers<[2], [1], [1], [2], [0, 0, 0, 1, 1, 2], [0], [0]>} : vector<2x8x8xf32>, vector<2x8x8xf32>, vector<2x8x8xf32> -> vector<2x8x8xf32>
    "tpu.trace_stop"() : () -> ()
    %53 = vector.extract_strided_slice %4 {offsets = [0, 0, 24], sizes = [2, 8, 8], strides = [1, 1, 1]} : vector<2x8x32xf32> to vector<2x8x8xf32>
    %54 = vector.extract_strided_slice %7 {offsets = [0, 0, 24], sizes = [2, 8, 8], strides = [1, 1, 1]} : vector<2x8x32xf32> to vector<2x8x8xf32>
    %55 = vector.extract_strided_slice %10 {offsets = [0, 0, 24], sizes = [2, 8, 8], strides = [1, 1, 1]} : vector<2x8x32xf32> to vector<2x8x8xf32>
    "tpu.trace_start"() <{level = 10 : i32, message = "btd,bsd->bts"}> : () -> ()
    %cst_23 = arith.constant dense<0.000000e+00> : vector<2x8x8xf32>
    %56 = tpu.matmul %53, %54, %cst_23 {dimension_numbers = #tpu.dot_dimension_numbers<[2], [2], [1], [1], [0, 0, 0, 1, 1, 1], [0], [0]>} : vector<2x8x8xf32>, vector<2x8x8xf32>, vector<2x8x8xf32> -> vector<2x8x8xf32>
    "tpu.trace_stop"() : () -> ()
    %cst_24 = arith.constant dense<0xFF800000> : vector<2x8xf32>
    %57 = vector.multi_reduction <maximumf>, %56, %cst_24 [2] : vector<2x8x8xf32> to vector<2x8xf32>
    %58 = vector.shape_cast %57 : vector<2x8xf32> to vector<2x8x1xf32>
    %59 = vector.broadcast %58 : vector<2x8x1xf32> to vector<2x8x8xf32>
    %60 = arith.subf %56, %59 : vector<2x8x8xf32>
    %61 = math.exp %60 : vector<2x8x8xf32>
    %cst_25 = arith.constant dense<0.000000e+00> : vector<2x8xf32>
    %62 = vector.multi_reduction <add>, %61, %cst_25 [2] : vector<2x8x8xf32> to vector<2x8xf32>
    %63 = vector.shape_cast %62 : vector<2x8xf32> to vector<2x8x1xf32>
    %64 = vector.broadcast %63 : vector<2x8x1xf32> to vector<2x8x8xf32>
    %65 = arith.divf %61, %64 : vector<2x8x8xf32>
    "tpu.trace_start"() <{level = 10 : i32, message = "bts,bsd->btd"}> : () -> ()
    %cst_26 = arith.constant dense<0.000000e+00> : vector<2x8x8xf32>
    %66 = tpu.matmul %65, %55, %cst_26 {dimension_numbers = #tpu.dot_dimension_numbers<[2], [1], [1], [2], [0, 0, 0, 1, 1, 2], [0], [0]>} : vector<2x8x8xf32>, vector<2x8x8xf32>, vector<2x8x8xf32> -> vector<2x8x8xf32>
    "tpu.trace_stop"() : () -> ()
    %67 = tpu.concatenate %24, %38, %52, %66 in 1 : vector<2x8x8xf32>, vector<2x8x8xf32>, vector<2x8x8xf32>, vector<2x8x8xf32> -> vector<2x32x8xf32>
    %68 = tpu.iota {dimensions = array<i32: 0>} : vector<8x32xi32>
    %69 = tpu.iota {dimensions = array<i32: 1>} : vector<8x32xi32>
    %c4_i32 = arith.constant 4 : i32
    %70 = vector.broadcast %c4_i32 : i32 to vector<8x32xi32>
    %71 = arith.muli %68, %70 : vector<8x32xi32>
    %c0_i32 = arith.constant 0 : i32
    %72 = vector.broadcast %c0_i32 : i32 to vector<8x32xi32>
    %73 = arith.addi %71, %72 : vector<8x32xi32>
    %74 = arith.cmpi eq, %69, %73 : vector<8x32xi32>
    %75 = arith.extui %74 : vector<8x32xi1> to vector<8x32xi32>
    %76 = arith.sitofp %75 : vector<8x32xi32> to vector<8x32xf32>
    %77 = vector.shape_cast %76 : vector<8x32xf32> to vector<1x8x32xf32>
    %78 = vector.shape_cast %77 : vector<1x8x32xf32> to vector<1x8x32xf32>
    %79 = vector.broadcast %78 : vector<1x8x32xf32> to vector<2x8x32xf32>
    "tpu.trace_start"() <{level = 10 : i32, message = "bru,bud->brd"}> : () -> ()
    %cst_27 = arith.constant dense<0.000000e+00> : vector<2x8x8xf32>
    %80 = tpu.matmul %79, %67, %cst_27 {dimension_numbers = #tpu.dot_dimension_numbers<[2], [1], [1], [2], [0, 0, 0, 1, 1, 2], [0], [0]>} : vector<2x8x32xf32>, vector<2x32x8xf32>, vector<2x8x8xf32> -> vector<2x8x8xf32>
    "tpu.trace_stop"() : () -> ()
    %c4_i32_28 = arith.constant 4 : i32
    %81 = vector.broadcast %c4_i32_28 : i32 to vector<8x32xi32>
    %82 = arith.muli %68, %81 : vector<8x32xi32>
    %c1_i32 = arith.constant 1 : i32
    %83 = vector.broadcast %c1_i32 : i32 to vector<8x32xi32>
    %84 = arith.addi %82, %83 : vector<8x32xi32>
    %85 = arith.cmpi eq, %69, %84 : vector<8x32xi32>
    %86 = arith.extui %85 : vector<8x32xi1> to vector<8x32xi32>
    %87 = arith.sitofp %86 : vector<8x32xi32> to vector<8x32xf32>
    %88 = vector.shape_cast %87 : vector<8x32xf32> to vector<1x8x32xf32>
    %89 = vector.shape_cast %88 : vector<1x8x32xf32> to vector<1x8x32xf32>
    %90 = vector.broadcast %89 : vector<1x8x32xf32> to vector<2x8x32xf32>
    "tpu.trace_start"() <{level = 10 : i32, message = "bru,bud->brd"}> : () -> ()
    %cst_29 = arith.constant dense<0.000000e+00> : vector<2x8x8xf32>
    %91 = tpu.matmul %90, %67, %cst_29 {dimension_numbers = #tpu.dot_dimension_numbers<[2], [1], [1], [2], [0, 0, 0, 1, 1, 2], [0], [0]>} : vector<2x8x32xf32>, vector<2x32x8xf32>, vector<2x8x8xf32> -> vector<2x8x8xf32>
    "tpu.trace_stop"() : () -> ()
    %c4_i32_30 = arith.constant 4 : i32
    %92 = vector.broadcast %c4_i32_30 : i32 to vector<8x32xi32>
    %93 = arith.muli %68, %92 : vector<8x32xi32>
    %c2_i32 = arith.constant 2 : i32
    %94 = vector.broadcast %c2_i32 : i32 to vector<8x32xi32>
    %95 = arith.addi %93, %94 : vector<8x32xi32>
    %96 = arith.cmpi eq, %69, %95 : vector<8x32xi32>
    %97 = arith.extui %96 : vector<8x32xi1> to vector<8x32xi32>
    %98 = arith.sitofp %97 : vector<8x32xi32> to vector<8x32xf32>
    %99 = vector.shape_cast %98 : vector<8x32xf32> to vector<1x8x32xf32>
    %100 = vector.shape_cast %99 : vector<1x8x32xf32> to vector<1x8x32xf32>
    %101 = vector.broadcast %100 : vector<1x8x32xf32> to vector<2x8x32xf32>
    "tpu.trace_start"() <{level = 10 : i32, message = "bru,bud->brd"}> : () -> ()
    %cst_31 = arith.constant dense<0.000000e+00> : vector<2x8x8xf32>
    %102 = tpu.matmul %101, %67, %cst_31 {dimension_numbers = #tpu.dot_dimension_numbers<[2], [1], [1], [2], [0, 0, 0, 1, 1, 2], [0], [0]>} : vector<2x8x32xf32>, vector<2x32x8xf32>, vector<2x8x8xf32> -> vector<2x8x8xf32>
    "tpu.trace_stop"() : () -> ()
    %c4_i32_32 = arith.constant 4 : i32
    %103 = vector.broadcast %c4_i32_32 : i32 to vector<8x32xi32>
    %104 = arith.muli %68, %103 : vector<8x32xi32>
    %c3_i32 = arith.constant 3 : i32
    %105 = vector.broadcast %c3_i32 : i32 to vector<8x32xi32>
    %106 = arith.addi %104, %105 : vector<8x32xi32>
    %107 = arith.cmpi eq, %69, %106 : vector<8x32xi32>
    %108 = arith.extui %107 : vector<8x32xi1> to vector<8x32xi32>
    %109 = arith.sitofp %108 : vector<8x32xi32> to vector<8x32xf32>
    %110 = vector.shape_cast %109 : vector<8x32xf32> to vector<1x8x32xf32>
    %111 = vector.shape_cast %110 : vector<1x8x32xf32> to vector<1x8x32xf32>
    %112 = vector.broadcast %111 : vector<1x8x32xf32> to vector<2x8x32xf32>
    "tpu.trace_start"() <{level = 10 : i32, message = "bru,bud->brd"}> : () -> ()
    %cst_33 = arith.constant dense<0.000000e+00> : vector<2x8x8xf32>
    %113 = tpu.matmul %112, %67, %cst_33 {dimension_numbers = #tpu.dot_dimension_numbers<[2], [1], [1], [2], [0, 0, 0, 1, 1, 2], [0], [0]>} : vector<2x8x32xf32>, vector<2x32x8xf32>, vector<2x8x8xf32> -> vector<2x8x8xf32>
    "tpu.trace_stop"() : () -> ()
    %114 = tpu.concatenate %80, %91, %102, %113 in 2 : vector<2x8x8xf32>, vector<2x8x8xf32>, vector<2x8x8xf32>, vector<2x8x8xf32> -> vector<2x8x32xf32>
    %115 = vector.shape_cast %114 : vector<2x8x32xf32> to vector<16x32xf32>
    %c0_34 = arith.constant 0 : index
    %c0_35 = arith.constant 0 : index
    %116 = vector.load %arg4[%c0_34, %c0_35] : memref<32x32xf32, #tpu.memory_space<vmem>>, vector<32x32xf32>
    %cst_36 = arith.constant dense<0.000000e+00> : vector<16x32xf32>
    %117 = tpu.matmul %115, %116, %cst_36 {dimension_numbers = #tpu.dot_dimension_numbers<[1], [0], [0], [1], [0, 0, 1, 1], [], []>} : vector<16x32xf32>, vector<32x32xf32>, vector<16x32xf32> -> vector<16x32xf32>
    %c0_37 = arith.constant 0 : index
    %c0_38 = arith.constant 0 : index
    %118 = vector.load %arg5[%c0_37, %c0_38] : memref<1x32xf32, #tpu.memory_space<vmem>>, vector<1x32xf32>
    %119 = vector.broadcast %118 : vector<1x32xf32> to vector<16x32xf32>
    %120 = arith.addf %117, %119 : vector<16x32xf32>
    %cst_39 = arith.constant 0.000000e+00 : f32
    %121 = vector.broadcast %cst_39 : f32 to vector<16x32xf32>
    %122 = arith.maximumf %120, %121 : vector<16x32xf32>
    %c0_40 = arith.constant 0 : index
    %c0_41 = arith.constant 0 : index
    %123 = vector.load %arg6[%c0_40, %c0_41] : memref<16x32xi8, #tpu.memory_space<vmem>>, vector<16x32xi8>
    %124 = arith.sitofp %123 : vector<16x32xi8> to vector<16x32xf32>
    %cst_42 = arith.constant 1.11111116 : f32
    %125 = vector.broadcast %cst_42 : f32 to vector<16x32xf32>
    %126 = arith.mulf %124, %125 : vector<16x32xf32>
    %127 = arith.mulf %122, %126 : vector<16x32xf32>
    %c0_43 = arith.constant 0 : index
    %c0_44 = arith.constant 0 : index
    %128 = vector.load %arg7[%c0_43, %c0_44] : memref<16x32xf32, #tpu.memory_space<vmem>>, vector<16x32xf32>
    tpu.vector_store %arg7[%c0_43, %c0_44], %127 {strides = array<i32>} : memref<16x32xf32, #tpu.memory_space<vmem>>, vector<16x32xf32>,
    return
  }
  func.func @transform_0(%arg0: i32) -> (i32, i32, i32) {
    %c0_i32 = arith.constant 0 : i32
    %c0_i32_0 = arith.constant 0 : i32
    %c0_i32_1 = arith.constant 0 : i32
    return %arg0, %c0_i32, %c0_i32_0 : i32, i32, i32
  }
  func.func @transform_1(%arg0: i32) -> (i32, i32, i32) {
    %c0_i32 = arith.constant 0 : i32
    %c0_i32_0 = arith.constant 0 : i32
    %c0_i32_1 = arith.constant 0 : i32
    return %arg0, %c0_i32, %c0_i32_0 : i32, i32, i32
  }
  func.func @transform_2(%arg0: i32) -> (i32, i32, i32) {
    %c0_i32 = arith.constant 0 : i32
    %c0_i32_0 = arith.constant 0 : i32
    %c0_i32_1 = arith.constant 0 : i32
    return %arg0, %c0_i32, %c0_i32_0 : i32, i32, i32
  }
  func.func @transform_3(%arg0: i32) -> (i32, i32) {
    %c0_i32 = arith.constant 0 : i32
    %c0_i32_0 = arith.constant 0 : i32
    %c0_i32_1 = arith.constant 0 : i32
    return %c0_i32, %c0_i32_0 : i32, i32
  }
  func.func @transform_4(%arg0: i32) -> (i32, i32) {
    %c0_i32 = arith.constant 0 : i32
    %c0_i32_0 = arith.constant 0 : i32
    %c0_i32_1 = arith.constant 0 : i32
    return %c0_i32, %c0_i32_0 : i32, i32
  }
  func.func @transform_5(%arg0: i32) -> (i32, i32) {
    %c0_i32 = arith.constant 0 : i32
    %c0_i32_0 = arith.constant 0 : i32
    return %arg0, %c0_i32 : i32, i32
  }
  func.func @transform_6(%arg0: i32) -> (i32, i32) {
    %c0_i32 = arith.constant 0 : i32
    %c0_i32_0 = arith.constant 0 : i32
    return %arg0, %c0_i32 : i32, i32
  }
}

</mosaic_0001>

<llo_original>
// kernel: tpu_custom_call.1
$region0: #{tpu_custom_call.1}
  #allocation0 [shape = 'u32[]', space=smem, size = 0x4, offset = 0x4, fixed_abs, tag = 'smem constant byte address 0x4 - core index']
  #allocation1 [shape = 'u32[144,128]{1,0:T(1,128)}', space=vmem, size = 0x12000, scoped, tag = 'internal scratch']
  %s0 = inlined_call_operand.hbm [shape: f32[2,8,32], index: 0, kind: input, shape index: {}]
  %s1 = inlined_call_operand.hbm [shape: f32[2,8,32], index: 1, kind: input, shape index: {}]
  %s2 = inlined_call_operand.hbm [shape: f32[2,8,32], index: 2, kind: input, shape index: {}]
  %s3 = inlined_call_operand.hbm [shape: f32[32,32], index: 3, kind: input, shape index: {}]
  %s4 = inlined_call_operand.vmem [shape: f32[1,32], index: 4, kind: input, shape index: {}]
  %s5 = inlined_call_operand.vmem [shape: s8[16,32], index: 5, kind: input, shape index: {}]
  %s6 = inlined_call_operand.hbm [shape: f32[16,32], index: 6, kind: output, shape index: {}]
  %s7 = sld [smem:[#allocation0]]
  $region50: #{tpu_custom_call.1} parent=0
    _
  %s9 = ssub.s32 1, %s7
  %s10 = scalar_select 0, %s9, %s7
  $region1: #{tpu_custom_call.1} parent=0
    #allocation2 [shape = 'u8[8192]{0}', space=vmem, size = 0x2000, scoped, tag = 'input window, operand 0, single buffered']
    #allocation3 [shape = 's32[1]{0}', space=sflag, size = 0x4, scoped, tag = 'scoped memory for tpu_custom_call.1']
    #allocation4 [shape = 's32[1]{0}', space=sflag, size = 0x4, scoped, tag = 'scoped memory for tpu_custom_call.1']
    #allocation5 [shape = 'u8[8192]{0}', space=vmem, size = 0x2000, scoped, tag = 'input window, operand 1, single buffered']
    #allocation6 [shape = 's32[1]{0}', space=sflag, size = 0x4, scoped, tag = 'scoped memory for tpu_custom_call.1']
    #allocation7 [shape = 'u8[8192]{0}', space=vmem, size = 0x2000, scoped, tag = 'input window, operand 2, single buffered']
    #allocation8 [shape = 'u8[16384]{0}', space=vmem, size = 0x4000, scoped, tag = 'input window, operand 3, single buffered']
    #allocation9 [shape = 's32[1]{0}', space=sflag, size = 0x4, scoped, tag = 'scoped memory for tpu_custom_call.1']
    #allocation10 [shape = 'u8[8192]{0}', space=vmem, size = 0x2000, scoped, tag = 'output window, operand 0, single buffered']
    %11 = vsyncpa [#allocation3], 0
    %12 = vsyncpa [#allocation6], 0
    %13 = vsyncpa [#allocation9], 0
    %14 = vsyncpa [#allocation4], 0
    // Predicated region
    $region2: #{tpu_custom_call.1} parent=1 // pred_check
      _
    $region3: #{tpu_custom_call.1} parent=1 // pred_check_branch
      %16 = sbr.rel (0) target = $region5
    $region4: #{tpu_custom_call.1} parent=1 // pred_region
      %s18 = ssub.s32 256, 256
      %19 = vsyncadd [#allocation3], %s18
      %s20 = sshll.u32 [#allocation2], 4
      %s21 = int_to_ptr.vmem [resolvable:$true] %s20
      %26 = dma.hbm_to_vmem [thread:$0]  %s0, 256, %s21, [#allocation3], 128, 128, 8
    $region5: #{tpu_custom_call.1} parent=1 // pred_fallthru
      _
    // Predicated region
    $region6: #{tpu_custom_call.1} parent=1 // pred_check
      _
    $region7: #{tpu_custom_call.1} parent=1 // pred_check_branch
      %28 = sbr.rel (0) target = $region9
    $region8: #{tpu_custom_call.1} parent=1 // pred_region
      %s30 = ssub.s32 256, 256
      %31 = vsyncadd [#allocation6], %s30
      %s32 = sshll.u32 [#allocation5], 4
      %s33 = int_to_ptr.vmem [resolvable:$true] %s32
      %38 = dma.hbm_to_vmem [thread:$0]  %s1, 256, %s33, [#allocation6], 128, 128, 8
    $region9: #{tpu_custom_call.1} parent=1 // pred_fallthru
      _
    // Predicated region
    $region10: #{tpu_custom_call.1} parent=1 // pred_check
      _
    $region11: #{tpu_custom_call.1} parent=1 // pred_check_branch
      %40 = sbr.rel (0) target = $region13
    $region12: #{tpu_custom_call.1} parent=1 // pred_region
      %s42 = ssub.s32 256, 256
      %43 = vsyncadd [#allocation6], %s42
      %s44 = sshll.u32 [#allocation7], 4
      %s45 = int_to_ptr.vmem [resolvable:$true] %s44
      %50 = dma.hbm_to_vmem [thread:$0]  %s2, 256, %s45, [#allocation6], 128, 128, 8
    $region13: #{tpu_custom_call.1} parent=1 // pred_fallthru
      _
    // Predicated region
    $region14: #{tpu_custom_call.1} parent=1 // pred_check
      _
    $region15: #{tpu_custom_call.1} parent=1 // pred_check_branch
      %52 = sbr.rel (0) target = $region17
    $region16: #{tpu_custom_call.1} parent=1 // pred_region
      %s54 = ssub.s32 512, 512
      %55 = vsyncadd [#allocation9], %s54
      %s56 = sshll.u32 [#allocation8], 4
      %s57 = int_to_ptr.vmem [resolvable:$true] %s56
      %62 = dma.hbm_to_vmem [thread:$0]  %s3, 512, %s57, [#allocation9], 128, 128, 8
    $region17: #{tpu_custom_call.1} parent=1 // pred_fallthru
      _
    // Predicated region
    $region18: #{tpu_custom_call.1} parent=1 // pred_check
      _
    $region19: #{tpu_custom_call.1} parent=1 // pred_check_branch
      %64 = sbr.rel (0) target = $region21
    $region20: #{tpu_custom_call.1} parent=1 // pred_region
      _
    $region21: #{tpu_custom_call.1} parent=1 // pred_fallthru
      _
    // Predicated region
    $region22: #{tpu_custom_call.1} parent=1 // pred_check
      _
    $region23: #{tpu_custom_call.1} parent=1 // pred_check_branch
      %66 = sbr.rel (0) target = $region25
    $region24: #{tpu_custom_call.1} parent=1 // pred_region
      _
    $region25: #{tpu_custom_call.1} parent=1 // pred_fallthru
      _
    // Predicated region
    $region26: #{tpu_custom_call.1} parent=1 // pred_check
      _
    $region27: #{tpu_custom_call.1} parent=1 // pred_check_branch
      %68 = sbr.rel (0) target = $region29
    $region28: #{tpu_custom_call.1} parent=1 // pred_region
      %69 = dma.done [#allocation3], 256
    $region29: #{tpu_custom_call.1} parent=1 // pred_fallthru
      _
    // Predicated region
    $region30: #{tpu_custom_call.1} parent=1 // pred_check
      _
    $region31: #{tpu_custom_call.1} parent=1 // pred_check_branch
      %71 = sbr.rel (0) target = $region33
    $region32: #{tpu_custom_call.1} parent=1 // pred_region
      %72 = dma.done [#allocation6], 256
    $region33: #{tpu_custom_call.1} parent=1 // pred_fallthru
      _
    // Predicated region
    $region34: #{tpu_custom_call.1} parent=1 // pred_check
      _
    $region35: #{tpu_custom_call.1} parent=1 // pred_check_branch
      %74 = sbr.rel (0) target = $region37
    $region36: #{tpu_custom_call.1} parent=1 // pred_region
      %75 = dma.done [#allocation6], 256
    $region37: #{tpu_custom_call.1} parent=1 // pred_fallthru
      _
    // Predicated region
    $region38: #{tpu_custom_call.1} parent=1 // pred_check
      _
    $region39: #{tpu_custom_call.1} parent=1 // pred_check_branch
      %77 = sbr.rel (0) target = $region41
    $region40: #{tpu_custom_call.1} parent=1 // pred_region
      %78 = dma.done [#allocation9], 512
    $region41: #{tpu_custom_call.1} parent=1 // pred_fallthru
      _
    %v79 = vld [vmem:[#allocation2] sm:$0xff]
    %v80 = vld [vmem:[#allocation2 + $0x8] sm:$0xff]
    %v81 = vmax.f32 %v79, 0.0
    %v82 = vmax.f32 %v80, 0.0
    %v83 = vmul.f32 %v81, 0.35355338
    %v84 = vmul.f32 %v82, 0.35355338
    %v85 = vld [vmem:[#allocation5] sm:$0xff]
    %v86 = vld [vmem:[#allocation5 + $0x8] sm:$0xff]
    %v87 = vmax.f32 %v85, 0.0
    %v88 = vmax.f32 %v86, 0.0
    %v89 = vld [vmem:[#allocation7] sm:$0xff]
    %v90 = vld [vmem:[#allocation7 + $0x8] sm:$0xff]
    %v91 = vmax.f32 %v89, 0.0
    %v92 = vmax.f32 %v90, 0.0
    %vm93 = vcmask 64512
    %v95 = vsel %vm93, %v83, 0
    %v98 = vsel %vm93, %v87, 0
    %100 = vmatprep.subr.mxu0 0.0
    %101 = vmatpush1.xpose.msra.mxu0 %v98
    %102 = vmatprep.subr.mxu0 0.0
    %103 = vmatpush1.xpose.msra.mxu0 0.0
    %104 = vmatprep.subr.mxu0 0.0
    %105 = vmatpush1.xpose.msra.mxu0 0.0
    %106 = vmatprep.subr.mxu0 0.0
    %107 = vmatpush1.xpose.msra.mxu0 0.0
    %108 = vmatprep.subr.mxu0 0.0
    %109 = vmatpush1.xpose.msra.mxu0 0.0
    %110 = vmatprep.subr.mxu0 0.0
    %111 = vmatpush1.xpose.msra.mxu0 0.0
    %112 = vmatprep.subr.mxu0 0.0
    %113 = vmatpush1.xpose.msra.mxu0 0.0
    %114 = vmatprep.subr.mxu0 0.0
    %115 = vmatpush1.xpose.msra.mxu0 0.0
    %116 = vmatprep.subr.mxu0 0.0
    %117 = vmatpush1.xpose.msra.mxu0 0.0
    %118 = vmatprep.subr.mxu0 0.0
    %119 = vmatpush1.xpose.msra.mxu0 0.0
    %120 = vmatprep.subr.mxu0 0.0
    %121 = vmatpush1.xpose.msra.mxu0 0.0
    %122 = vmatprep.subr.mxu0 0.0
    %123 = vmatpush1.xpose.msra.mxu0 0.0
    %124 = vmatprep.subr.mxu0 0.0
    %125 = vmatpush1.xpose.msra.mxu0 0.0
    %126 = vmatprep.subr.mxu0 0.0
    %127 = vmatpush1.xpose.msra.mxu0 0.0
    %128 = vmatprep.subr.mxu0 0.0
    %129 = vmatpush1.xpose.msra.mxu0 0.0
    %130 = vmatprep.subr.mxu0 0.0
    %131 = vmatpush1.xpose.msra.mxu0 0.0
    %132 = vmatprep.subr.mxu0 0.0
    %133 = vmatpush1.xpose.msra.mxu0 0.0
    %134 = vmatprep.subr.mxu0 0.0
    %135 = vmatpush1.xpose.msra.mxu0 0.0
    %136 = vmatprep.subr.mxu0 0.0
    %137 = vmatpush1.xpose.msra.mxu0 0.0
    %138 = vmatprep.subr.mxu0 0.0
    %139 = vmatpush1.xpose.msra.mxu0 0.0
    %140 = vmatprep.subr.mxu0 0.0
    %141 = vmatpush1.xpose.msra.mxu0 0.0
    %142 = vmatprep.subr.mxu0 0.0
    %143 = vmatpush1.xpose.msra.mxu0 0.0
    %144 = vmatprep.subr.mxu0 0.0
    %145 = vmatpush1.xpose.msra.mxu0 0.0
    %146 = vmatprep.subr.mxu0 0.0
    %147 = vmatpush1.xpose.msra.mxu0 0.0
    %148 = vmatprep.subr.mxu0 0.0
    %149 = vmatpush1.xpose.msra.mxu0 0.0
    %150 = vmatprep.subr.mxu0 0.0
    %151 = vmatpush1.xpose.msra.mxu0 0.0
    %152 = vmatprep.subr.mxu0 0.0
    %153 = vmatpush1.xpose.msra.mxu0 0.0
    %154 = vmatprep.subr.mxu0 0.0
    %155 = vmatpush1.xpose.msra.mxu0 0.0
    %156 = vmatprep.subr.mxu0 0.0
    %157 = vmatpush1.xpose.msra.mxu0 0.0
    %158 = vmatprep.subr.mxu0 0.0
    %159 = vmatpush1.xpose.msra.mxu0 0.0
    %160 = vmatprep.subr.mxu0 0.0
    %161 = vmatpush1.xpose.msra.mxu0 0.0
    %162 = vmatprep.subr.mxu0 0.0
    %163 = vmatpush1.xpose.msra.mxu0 0.0
    %164 = vmatprep.mubr.f32.mxu0 0.0
    %165 = vmatmul.mubr.f32.gmra.mrb[0].mxu0 %v95
    %v166 = vpop.f32.mrb[0].mxu0
    %v167 = vadd.f32 0.0, %v166
    %v168 = vpop.f32.mrb[0].mxu0
    %169 = vdwg.mxu0
    %v171 = vsel %vm93, %v84, 0
    %v174 = vsel %vm93, %v88, 0
    %176 = vmatprep.subr.mxu0 0.0
    %177 = vmatpush1.xpose.msra.mxu0 %v174
    %178 = vmatprep.subr.mxu0 0.0
    %179 = vmatpush1.xpose.msra.mxu0 0.0
    %180 = vmatprep.subr.mxu0 0.0
    %181 = vmatpush1.xpose.msra.mxu0 0.0
    %182 = vmatprep.subr.mxu0 0.0
    %183 = vmatpush1.xpose.msra.mxu0 0.0
    %184 = vmatprep.subr.mxu0 0.0
    %185 = vmatpush1.xpose.msra.mxu0 0.0
    %186 = vmatprep.subr.mxu0 0.0
    %187 = vmatpush1.xpose.msra.mxu0 0.0
    %188 = vmatprep.subr.mxu0 0.0
    %189 = vmatpush1.xpose.msra.mxu0 0.0
    %190 = vmatprep.subr.mxu0 0.0
    %191 = vmatpush1.xpose.msra.mxu0 0.0
    %192 = vmatprep.subr.mxu0 0.0
    %193 = vmatpush1.xpose.msra.mxu0 0.0
    %194 = vmatprep.subr.mxu0 0.0
    %195 = vmatpush1.xpose.msra.mxu0 0.0
    %196 = vmatprep.subr.mxu0 0.0
    %197 = vmatpush1.xpose.msra.mxu0 0.0
    %198 = vmatprep.subr.mxu0 0.0
    %199 = vmatpush1.xpose.msra.mxu0 0.0
    %200 = vmatprep.subr.mxu0 0.0
    %201 = vmatpush1.xpose.msra.mxu0 0.0
    %202 = vmatprep.subr.mxu0 0.0
    %203 = vmatpush1.xpose.msra.mxu0 0.0
    %204 = vmatprep.subr.mxu0 0.0
    %205 = vmatpush1.xpose.msra.mxu0 0.0
    %206 = vmatprep.subr.mxu0 0.0
    %207 = vmatpush1.xpose.msra.mxu0 0.0
    %208 = vmatprep.subr.mxu0 0.0
    %209 = vmatpush1.xpose.msra.mxu0 0.0
    %210 = vmatprep.subr.mxu0 0.0
    %211 = vmatpush1.xpose.msra.mxu0 0.0
    %212 = vmatprep.subr.mxu0 0.0
    %213 = vmatpush1.xpose.msra.mxu0 0.0
    %214 = vmatprep.subr.mxu0 0.0
    %215 = vmatpush1.xpose.msra.mxu0 0.0
    %216 = vmatprep.subr.mxu0 0.0
    %217 = vmatpush1.xpose.msra.mxu0 0.0
    %218 = vmatprep.subr.mxu0 0.0
    %219 = vmatpush1.xpose.msra.mxu0 0.0
    %220 = vmatprep.subr.mxu0 0.0
    %221 = vmatpush1.xpose.msra.mxu0 0.0
    %222 = vmatprep.subr.mxu0 0.0
    %223 = vmatpush1.xpose.msra.mxu0 0.0
    %224 = vmatprep.subr.mxu0 0.0
    %225 = vmatpush1.xpose.msra.mxu0 0.0
    %226 = vmatprep.subr.mxu0 0.0
    %227 = vmatpush1.xpose.msra.mxu0 0.0
    %228 = vmatprep.subr.mxu0 0.0
    %229 = vmatpush1.xpose.msra.mxu0 0.0
    %230 = vmatprep.subr.mxu0 0.0
    %231 = vmatpush1.xpose.msra.mxu0 0.0
    %232 = vmatprep.subr.mxu0 0.0
    %233 = vmatpush1.xpose.msra.mxu0 0.0
    %234 = vmatprep.subr.mxu0 0.0
    %235 = vmatpush1.xpose.msra.mxu0 0.0
    %236 = vmatprep.subr.mxu0 0.0
    %237 = vmatpush1.xpose.msra.mxu0 0.0
    %238 = vmatprep.subr.mxu0 0.0
    %239 = vmatpush1.xpose.msra.mxu0 0.0
    %240 = vmatprep.mubr.f32.mxu0 0.0
    %241 = vmatmul.mubr.f32.gmra.mrb[0].mxu0 %v171
    %v242 = vpop.f32.mrb[0].mxu0
    %v243 = vadd.f32 0.0, %v242
    %v244 = vpop.f32.mrb[0].mxu0
    %245 = vdwg.mxu0
    %v246 = vsel %vm93, %v167, -inf
    %247 = vmax.xlane.f32.xlu0 %v246
    %v248 = vpop.xlane.xlu0 %247
    %v249 = vsel %vm93, %v243, -inf
    %250 = vmax.xlane.f32.xlu0 %v249
    %v251 = vpop.xlane.xlu0 %250
    %v252 = vsub.f32 %v167, %v248
    %v253 = vsub.f32 %v243, %v251
    %v254 = vmul.f32 %v252, 1.442695
    %v255 = vpow.pop %v254
    %v256 = vmul.f32 %v253, 1.442695
    %v257 = vpow.pop %v256
    %v258 = vsel %vm93, %v255, 0.0
    %259 = vadd.xlane.f32.xlu0 %v258
    %v260 = vpop.xlane.xlu0 %259
    %v261 = vsel %vm93, %v257, 0.0
    %262 = vadd.xlane.f32.xlu0 %v261
    %v263 = vpop.xlane.xlu0 %262
    %v264 = vrcp.pop %v260
    %v265 = vmul.f32 %v255, %v264
    %v266 = vrcp.pop %v263
    %v267 = vmul.f32 %v257, %v266
    %v269 = vsel %vm93, %v265, 0
    %271 = vmatprep.subr.mxu0 0.0
    %272 = vmatpush1.msra.mxu0 %v91
    %273 = vmatprep.subr.mxu0 0.0
    %274 = vmatpush1.msra.mxu0 0.0
    %275 = vmatprep.subr.mxu0 0.0
    %276 = vmatpush1.msra.mxu0 0.0
    %277 = vmatprep.subr.mxu0 0.0
    %278 = vmatpush1.msra.mxu0 0.0
    %279 = vmatprep.subr.mxu0 0.0
    %280 = vmatpush1.msra.mxu0 0.0
    %281 = vmatprep.subr.mxu0 0.0
    %282 = vmatpush1.msra.mxu0 0.0
    %283 = vmatprep.subr.mxu0 0.0
    %284 = vmatpush1.msra.mxu0 0.0
    %285 = vmatprep.subr.mxu0 0.0
    %286 = vmatpush1.msra.mxu0 0.0
    %287 = vmatprep.subr.mxu0 0.0
    %288 = vmatpush1.msra.mxu0 0.0
    %289 = vmatprep.subr.mxu0 0.0
    %290 = vmatpush1.msra.mxu0 0.0
    %291 = vmatprep.subr.mxu0 0.0
    %292 = vmatpush1.msra.mxu0 0.0
    %293 = vmatprep.subr.mxu0 0.0
    %294 = vmatpush1.msra.mxu0 0.0
    %295 = vmatprep.subr.mxu0 0.0
    %296 = vmatpush1.msra.mxu0 0.0
    %297 = vmatprep.subr.mxu0 0.0
    %298 = vmatpush1.msra.mxu0 0.0
    %299 = vmatprep.subr.mxu0 0.0
    %300 = vmatpush1.msra.mxu0 0.0
    %301 = vmatprep.subr.mxu0 0.0
    %302 = vmatpush1.msra.mxu0 0.0
    %303 = vmatprep.subr.mxu0 0.0
    %304 = vmatpush1.msra.mxu0 0.0
    %305 = vmatprep.subr.mxu0 0.0
    %306 = vmatpush1.msra.mxu0 0.0
    %307 = vmatprep.subr.mxu0 0.0
    %308 = vmatpush1.msra.mxu0 0.0
    %309 = vmatprep.subr.mxu0 0.0
    %310 = vmatpush1.msra.mxu0 0.0
    %311 = vmatprep.subr.mxu0 0.0
    %312 = vmatpush1.msra.mxu0 0.0
    %313 = vmatprep.subr.mxu0 0.0
    %314 = vmatpush1.msra.mxu0 0.0
    %315 = vmatprep.subr.mxu0 0.0
    %316 = vmatpush1.msra.mxu0 0.0
    %317 = vmatprep.subr.mxu0 0.0
    %318 = vmatpush1.msra.mxu0 0.0
    %319 = vmatprep.subr.mxu0 0.0
    %320 = vmatpush1.msra.mxu0 0.0
    %321 = vmatprep.subr.mxu0 0.0
    %322 = vmatpush1.msra.mxu0 0.0
    %323 = vmatprep.subr.mxu0 0.0
    %324 = vmatpush1.msra.mxu0 0.0
    %325 = vmatprep.subr.mxu0 0.0
    %326 = vmatpush1.msra.mxu0 0.0
    %327 = vmatprep.subr.mxu0 0.0
    %328 = vmatpush1.msra.mxu0 0.0
    %329 = vmatprep.subr.mxu0 0.0
    %330 = vmatpush1.msra.mxu0 0.0
    %331 = vmatprep.subr.mxu0 0.0
    %332 = vmatpush1.msra.mxu0 0.0
    %333 = vmatprep.subr.mxu0 0.0
    %334 = vmatpush1.msra.mxu0 0.0
    %335 = vmatprep.mubr.f32.mxu0 0.0
    %336 = vmatmul.mubr.f32.gmra.mrb[0].mxu0 %v269
    %v337 = vpop.f32.mrb[0].mxu0
    %v338 = vadd.f32 0.0, %v337
    %v339 = vpop.f32.mrb[0].mxu0
    %340 = vdwg.mxu0
    %v342 = vsel %vm93, %v267, 0
    %344 = vmatprep.subr.mxu0 0.0
    %345 = vmatpush1.msra.mxu0 %v92
    %346 = vmatprep.subr.mxu0 0.0
    %347 = vmatpush1.msra.mxu0 0.0
    %348 = vmatprep.subr.mxu0 0.0
    %349 = vmatpush1.msra.mxu0 0.0
    %350 = vmatprep.subr.mxu0 0.0
    %351 = vmatpush1.msra.mxu0 0.0
    %352 = vmatprep.subr.mxu0 0.0
    %353 = vmatpush1.msra.mxu0 0.0
    %354 = vmatprep.subr.mxu0 0.0
    %355 = vmatpush1.msra.mxu0 0.0
    %356 = vmatprep.subr.mxu0 0.0
    %357 = vmatpush1.msra.mxu0 0.0
    %358 = vmatprep.subr.mxu0 0.0
    %359 = vmatpush1.msra.mxu0 0.0
    %360 = vmatprep.subr.mxu0 0.0
    %361 = vmatpush1.msra.mxu0 0.0
    %362 = vmatprep.subr.mxu0 0.0
    %363 = vmatpush1.msra.mxu0 0.0
    %364 = vmatprep.subr.mxu0 0.0
    %365 = vmatpush1.msra.mxu0 0.0
    %366 = vmatprep.subr.mxu0 0.0
    %367 = vmatpush1.msra.mxu0 0.0
    %368 = vmatprep.subr.mxu0 0.0
    %369 = vmatpush1.msra.mxu0 0.0
    %370 = vmatprep.subr.mxu0 0.0
    %371 = vmatpush1.msra.mxu0 0.0
    %372 = vmatprep.subr.mxu0 0.0
    %373 = vmatpush1.msra.mxu0 0.0
    %374 = vmatprep.subr.mxu0 0.0
    %375 = vmatpush1.msra.mxu0 0.0
    %376 = vmatprep.subr.mxu0 0.0
    %377 = vmatpush1.msra.mxu0 0.0
    %378 = vmatprep.subr.mxu0 0.0
    %379 = vmatpush1.msra.mxu0 0.0
    %380 = vmatprep.subr.mxu0 0.0
    %381 = vmatpush1.msra.mxu0 0.0
    %382 = vmatprep.subr.mxu0 0.0
    %383 = vmatpush1.msra.mxu0 0.0
    %384 = vmatprep.subr.mxu0 0.0
    %385 = vmatpush1.msra.mxu0 0.0
    %386 = vmatprep.subr.mxu0 0.0
    %387 = vmatpush1.msra.mxu0 0.0
    %388 = vmatprep.subr.mxu0 0.0
    %389 = vmatpush1.msra.mxu0 0.0
    %390 = vmatprep.subr.mxu0 0.0
    %391 = vmatpush1.msra.mxu0 0.0
    %392 = vmatprep.subr.mxu0 0.0
    %393 = vmatpush1.msra.mxu0 0.0
    %394 = vmatprep.subr.mxu0 0.0
    %395 = vmatpush1.msra.mxu0 0.0
    %396 = vmatprep.subr.mxu0 0.0
    %397 = vmatpush1.msra.mxu0 0.0
    %398 = vmatprep.subr.mxu0 0.0
    %399 = vmatpush1.msra.mxu0 0.0
    %400 = vmatprep.subr.mxu0 0.0
    %401 = vmatpush1.msra.mxu0 0.0
    %402 = vmatprep.subr.mxu0 0.0
    %403 = vmatpush1.msra.mxu0 0.0
    %404 = vmatprep.subr.mxu0 0.0
    %405 = vmatpush1.msra.mxu0 0.0
    %406 = vmatprep.subr.mxu0 0.0
    %407 = vmatpush1.msra.mxu0 0.0
    %408 = vmatprep.mubr.f32.mxu0 0.0
    %409 = vmatmul.mubr.f32.gmra.mrb[0].mxu0 %v342
    %v410 = vpop.f32.mrb[0].mxu0
    %v411 = vadd.f32 0.0, %v410
    %v412 = vpop.f32.mrb[0].mxu0
    %413 = vdwg.mxu0
    %414 = vrot.lane.b32.xlu0 %v83, 120
    %v415 = vpop.permute.xlu0 %414
    %416 = vrot.lane.b32.xlu0 %v87, 120
    %v417 = vpop.permute.xlu0 %416
    %v418 = vsel %vm93, %v415, 0
    %v420 = vsel %vm93, %v417, 0
    %422 = vmatprep.subr.mxu0 0.0
    %423 = vmatpush1.xpose.msra.mxu0 %v420
    %424 = vmatprep.subr.mxu0 0.0
    %425 = vmatpush1.xpose.msra.mxu0 0.0
    %426 = vmatprep.subr.mxu0 0.0
    %427 = vmatpush1.xpose.msra.mxu0 0.0
    %428 = vmatprep.subr.mxu0 0.0
    %429 = vmatpush1.xpose.msra.mxu0 0.0
    %430 = vmatprep.subr.mxu0 0.0
    %431 = vmatpush1.xpose.msra.mxu0 0.0
    %432 = vmatprep.subr.mxu0 0.0
    %433 = vmatpush1.xpose.msra.mxu0 0.0
    %434 = vmatprep.subr.mxu0 0.0
    %435 = vmatpush1.xpose.msra.mxu0 0.0
    %436 = vmatprep.subr.mxu0 0.0
    %437 = vmatpush1.xpose.msra.mxu0 0.0
    %438 = vmatprep.subr.mxu0 0.0
    %439 = vmatpush1.xpose.msra.mxu0 0.0
    %440 = vmatprep.subr.mxu0 0.0
    %441 = vmatpush1.xpose.msra.mxu0 0.0
    %442 = vmatprep.subr.mxu0 0.0
    %443 = vmatpush1.xpose.msra.mxu0 0.0
    %444 = vmatprep.subr.mxu0 0.0
    %445 = vmatpush1.xpose.msra.mxu0 0.0
    %446 = vmatprep.subr.mxu0 0.0
    %447 = vmatpush1.xpose.msra.mxu0 0.0
    %448 = vmatprep.subr.mxu0 0.0
    %449 = vmatpush1.xpose.msra.mxu0 0.0
    %450 = vmatprep.subr.mxu0 0.0
    %451 = vmatpush1.xpose.msra.mxu0 0.0
    %452 = vmatprep.subr.mxu0 0.0
    %453 = vmatpush1.xpose.msra.mxu0 0.0
    %454 = vmatprep.subr.mxu0 0.0
    %455 = vmatpush1.xpose.msra.mxu0 0.0
    %456 = vmatprep.subr.mxu0 0.0
    %457 = vmatpush1.xpose.msra.mxu0 0.0
    %458 = vmatprep.subr.mxu0 0.0
    %459 = vmatpush1.xpose.msra.mxu0 0.0
    %460 = vmatprep.subr.mxu0 0.0
    %461 = vmatpush1.xpose.msra.mxu0 0.0
    %462 = vmatprep.subr.mxu0 0.0
    %463 = vmatpush1.xpose.msra.mxu0 0.0
    %464 = vmatprep.subr.mxu0 0.0
    %465 = vmatpush1.xpose.msra.mxu0 0.0
    %466 = vmatprep.subr.mxu0 0.0
    %467 = vmatpush1.xpose.msra.mxu0 0.0
    %468 = vmatprep.subr.mxu0 0.0
    %469 = vmatpush1.xpose.msra.mxu0 0.0
    %470 = vmatprep.subr.mxu0 0.0
    %471 = vmatpush1.xpose.msra.mxu0 0.0
    %472 = vmatprep.subr.mxu0 0.0
    %473 = vmatpush1.xpose.msra.mxu0 0.0
    %474 = vmatprep.subr.mxu0 0.0
    %475 = vmatpush1.xpose.msra.mxu0 0.0
    %476 = vmatprep.subr.mxu0 0.0
    %477 = vmatpush1.xpose.msra.mxu0 0.0
    %478 = vmatprep.subr.mxu0 0.0
    %479 = vmatpush1.xpose.msra.mxu0 0.0
    %480 = vmatprep.subr.mxu0 0.0
    %481 = vmatpush1.xpose.msra.mxu0 0.0
    %482 = vmatprep.subr.mxu0 0.0
    %483 = vmatpush1.xpose.msra.mxu0 0.0
    %484 = vmatprep.subr.mxu0 0.0
    %485 = vmatpush1.xpose.msra.mxu0 0.0
    %486 = vmatprep.mubr.f32.mxu0 0.0
    %487 = vmatmul.mubr.f32.gmra.mrb[0].mxu0 %v418
    %v488 = vpop.f32.mrb[0].mxu0
    %v489 = vadd.f32 0.0, %v488
    %v490 = vpop.f32.mrb[0].mxu0
    %491 = vdwg.mxu0
    %492 = vrot.lane.b32.xlu0 %v84, 120
    %v493 = vpop.permute.xlu0 %492
    %494 = vrot.lane.b32.xlu0 %v88, 120
    %v495 = vpop.permute.xlu0 %494
    %v496 = vsel %vm93, %v493, 0
    %v498 = vsel %vm93, %v495, 0
    %500 = vmatprep.subr.mxu0 0.0
    %501 = vmatpush1.xpose.msra.mxu0 %v498
    %502 = vmatprep.subr.mxu0 0.0
    %503 = vmatpush1.xpose.msra.mxu0 0.0
    %504 = vmatprep.subr.mxu0 0.0
    %505 = vmatpush1.xpose.msra.mxu0 0.0
    %506 = vmatprep.subr.mxu0 0.0
    %507 = vmatpush1.xpose.msra.mxu0 0.0
    %508 = vmatprep.subr.mxu0 0.0
    %509 = vmatpush1.xpose.msra.mxu0 0.0
    %510 = vmatprep.subr.mxu0 0.0
    %511 = vmatpush1.xpose.msra.mxu0 0.0
    %512 = vmatprep.subr.mxu0 0.0
    %513 = vmatpush1.xpose.msra.mxu0 0.0
    %514 = vmatprep.subr.mxu0 0.0
    %515 = vmatpush1.xpose.msra.mxu0 0.0
    %516 = vmatprep.subr.mxu0 0.0
    %517 = vmatpush1.xpose.msra.mxu0 0.0
    %518 = vmatprep.subr.mxu0 0.0
    %519 = vmatpush1.xpose.msra.mxu0 0.0
    %520 = vmatprep.subr.mxu0 0.0
    %521 = vmatpush1.xpose.msra.mxu0 0.0
    %522 = vmatprep.subr.mxu0 0.0
    %523 = vmatpush1.xpose.msra.mxu0 0.0
    %524 = vmatprep.subr.mxu0 0.0
    %525 = vmatpush1.xpose.msra.mxu0 0.0
    %526 = vmatprep.subr.mxu0 0.0
    %527 = vmatpush1.xpose.msra.mxu0 0.0
    %528 = vmatprep.subr.mxu0 0.0
    %529 = vmatpush1.xpose.msra.mxu0 0.0
    %530 = vmatprep.subr.mxu0 0.0
    %531 = vmatpush1.xpose.msra.mxu0 0.0
    %532 = vmatprep.subr.mxu0 0.0
    %533 = vmatpush1.xpose.msra.mxu0 0.0
    %534 = vmatprep.subr.mxu0 0.0
    %535 = vmatpush1.xpose.msra.mxu0 0.0
    %536 = vmatprep.subr.mxu0 0.0
    %537 = vmatpush1.xpose.msra.mxu0 0.0
    %538 = vmatprep.subr.mxu0 0.0
    %539 = vmatpush1.xpose.msra.mxu0 0.0
    %540 = vmatprep.subr.mxu0 0.0
    %541 = vmatpush1.xpose.msra.mxu0 0.0
    %542 = vmatprep.subr.mxu0 0.0
    %543 = vmatpush1.xpose.msra.mxu0 0.0
    %544 = vmatprep.subr.mxu0 0.0
    %545 = vmatpush1.xpose.msra.mxu0 0.0
    %546 = vmatprep.subr.mxu0 0.0
    %547 = vmatpush1.xpose.msra.mxu0 0.0
    %548 = vmatprep.subr.mxu0 0.0
    %549 = vmatpush1.xpose.msra.mxu0 0.0
    %550 = vmatprep.subr.mxu0 0.0
    %551 = vmatpush1.xpose.msra.mxu0 0.0
    %552 = vmatprep.subr.mxu0 0.0
    %553 = vmatpush1.xpose.msra.mxu0 0.0
    %554 = vmatprep.subr.mxu0 0.0
    %555 = vmatpush1.xpose.msra.mxu0 0.0
    %556 = vmatprep.subr.mxu0 0.0
    %557 = vmatpush1.xpose.msra.mxu0 0.0
    %558 = vmatprep.subr.mxu0 0.0
    %559 = vmatpush1.xpose.msra.mxu0 0.0
    %560 = vmatprep.subr.mxu0 0.0
    %561 = vmatpush1.xpose.msra.mxu0 0.0
    %562 = vmatprep.subr.mxu0 0.0
    %563 = vmatpush1.xpose.msra.mxu0 0.0
    %564 = vmatprep.mubr.f32.mxu0 0.0
    %565 = vmatmul.mubr.f32.gmra.mrb[0].mxu0 %v496
    %v566 = vpop.f32.mrb[0].mxu0
    %v567 = vadd.f32 0.0, %v566
    %v568 = vpop.f32.mrb[0].mxu0
    %569 = vdwg.mxu0
    %v570 = vsel %vm93, %v489, -inf
    %571 = vmax.xlane.f32.xlu0 %v570
    %v572 = vpop.xlane.xlu0 %571
    %v573 = vsel %vm93, %v567, -inf
    %574 = vmax.xlane.f32.xlu0 %v573
    %v575 = vpop.xlane.xlu0 %574
    %v576 = vsub.f32 %v489, %v572
    %v577 = vsub.f32 %v567, %v575
    %v578 = vmul.f32 %v576, 1.442695
    %v579 = vpow.pop %v578
    %v580 = vmul.f32 %v577, 1.442695
    %v581 = vpow.pop %v580
    %v582 = vsel %vm93, %v579, 0.0
    %583 = vadd.xlane.f32.xlu0 %v582
    %v584 = vpop.xlane.xlu0 %583
    %v585 = vsel %vm93, %v581, 0.0
    %586 = vadd.xlane.f32.xlu0 %v585
    %v587 = vpop.xlane.xlu0 %586
    %v588 = vrcp.pop %v584
    %v589 = vmul.f32 %v579, %v588
    %v590 = vrcp.pop %v587
    %v591 = vmul.f32 %v581, %v590
    %593 = vrot.lane.b32.xlu0 %v91, 120
    %v594 = vpop.permute.xlu0 %593
    %v597 = vsel %vm93, %v589, 0
    %599 = vmatprep.subr.mxu0 0.0
    %600 = vmatpush1.msra.mxu0 %v594
    %601 = vmatprep.subr.mxu0 0.0
    %602 = vmatpush1.msra.mxu0 0.0
    %603 = vmatprep.subr.mxu0 0.0
    %604 = vmatpush1.msra.mxu0 0.0
    %605 = vmatprep.subr.mxu0 0.0
    %606 = vmatpush1.msra.mxu0 0.0
    %607 = vmatprep.subr.mxu0 0.0
    %608 = vmatpush1.msra.mxu0 0.0
    %609 = vmatprep.subr.mxu0 0.0
    %610 = vmatpush1.msra.mxu0 0.0
    %611 = vmatprep.subr.mxu0 0.0
    %612 = vmatpush1.msra.mxu0 0.0
    %613 = vmatprep.subr.mxu0 0.0
    %614 = vmatpush1.msra.mxu0 0.0
    %615 = vmatprep.subr.mxu0 0.0
    %616 = vmatpush1.msra.mxu0 0.0
    %617 = vmatprep.subr.mxu0 0.0
    %618 = vmatpush1.msra.mxu0 0.0
    %619 = vmatprep.subr.mxu0 0.0
    %620 = vmatpush1.msra.mxu0 0.0
    %621 = vmatprep.subr.mxu0 0.0
    %622 = vmatpush1.msra.mxu0 0.0
    %623 = vmatprep.subr.mxu0 0.0
    %624 = vmatpush1.msra.mxu0 0.0
    %625 = vmatprep.subr.mxu0 0.0
    %626 = vmatpush1.msra.mxu0 0.0
    %627 = vmatprep.subr.mxu0 0.0
    %628 = vmatpush1.msra.mxu0 0.0
    %629 = vmatprep.subr.mxu0 0.0
    %630 = vmatpush1.msra.mxu0 0.0
    %631 = vmatprep.subr.mxu0 0.0
    %632 = vmatpush1.msra.mxu0 0.0
    %633 = vmatprep.subr.mxu0 0.0
    %634 = vmatpush1.msra.mxu0 0.0
    %635 = vmatprep.subr.mxu0 0.0
    %636 = vmatpush1.msra.mxu0 0.0
    %637 = vmatprep.subr.mxu0 0.0
    %638 = vmatpush1.msra.mxu0 0.0
    %639 = vmatprep.subr.mxu0 0.0
    %640 = vmatpush1.msra.mxu0 0.0
    %641 = vmatprep.subr.mxu0 0.0
    %642 = vmatpush1.msra.mxu0 0.0
    %643 = vmatprep.subr.mxu0 0.0
    %644 = vmatpush1.msra.mxu0 0.0
    %645 = vmatprep.subr.mxu0 0.0
    %646 = vmatpush1.msra.mxu0 0.0
    %647 = vmatprep.subr.mxu0 0.0
    %648 = vmatpush1.msra.mxu0 0.0
    %649 = vmatprep.subr.mxu0 0.0
    %650 = vmatpush1.msra.mxu0 0.0
    %651 = vmatprep.subr.mxu0 0.0
    %652 = vmatpush1.msra.mxu0 0.0
    %653 = vmatprep.subr.mxu0 0.0
    %654 = vmatpush1.msra.mxu0 0.0
    %655 = vmatprep.subr.mxu0 0.0
    %656 = vmatpush1.msra.mxu0 0.0
    %657 = vmatprep.subr.mxu0 0.0
    %658 = vmatpush1.msra.mxu0 0.0
    %659 = vmatprep.subr.mxu0 0.0
    %660 = vmatpush1.msra.mxu0 0.0
    %661 = vmatprep.subr.mxu0 0.0
    %662 = vmatpush1.msra.mxu0 0.0
    %663 = vmatprep.mubr.f32.mxu0 0.0
    %664 = vmatmul.mubr.f32.gmra.mrb[0].mxu0 %v597
    %v665 = vpop.f32.mrb[0].mxu0
    %v666 = vadd.f32 0.0, %v665
    %v667 = vpop.f32.mrb[0].mxu0
    %668 = vdwg.mxu0
    %670 = vrot.lane.b32.xlu0 %v92, 120
    %v671 = vpop.permute.xlu0 %670
    %v674 = vsel %vm93, %v591, 0
    %676 = vmatprep.subr.mxu0 0.0
    %677 = vmatpush1.msra.mxu0 %v671
    %678 = vmatprep.subr.mxu0 0.0
    %679 = vmatpush1.msra.mxu0 0.0
    %680 = vmatprep.subr.mxu0 0.0
    %681 = vmatpush1.msra.mxu0 0.0
    %682 = vmatprep.subr.mxu0 0.0
    %683 = vmatpush1.msra.mxu0 0.0
    %684 = vmatprep.subr.mxu0 0.0
    %685 = vmatpush1.msra.mxu0 0.0
    %686 = vmatprep.subr.mxu0 0.0
    %687 = vmatpush1.msra.mxu0 0.0
    %688 = vmatprep.subr.mxu0 0.0
    %689 = vmatpush1.msra.mxu0 0.0
    %690 = vmatprep.subr.mxu0 0.0
    %691 = vmatpush1.msra.mxu0 0.0
    %692 = vmatprep.subr.mxu0 0.0
    %693 = vmatpush1.msra.mxu0 0.0
    %694 = vmatprep.subr.mxu0 0.0
    %695 = vmatpush1.msra.mxu0 0.0
    %696 = vmatprep.subr.mxu0 0.0
    %697 = vmatpush1.msra.mxu0 0.0
    %698 = vmatprep.subr.mxu0 0.0
    %699 = vmatpush1.msra.mxu0 0.0
    %700 = vmatprep.subr.mxu0 0.0
    %701 = vmatpush1.msra.mxu0 0.0
    %702 = vmatprep.subr.mxu0 0.0
    %703 = vmatpush1.msra.mxu0 0.0
    %704 = vmatprep.subr.mxu0 0.0
    %705 = vmatpush1.msra.mxu0 0.0
    %706 = vmatprep.subr.mxu0 0.0
    %707 = vmatpush1.msra.mxu0 0.0
    %708 = vmatprep.subr.mxu0 0.0
    %709 = vmatpush1.msra.mxu0 0.0
    %710 = vmatprep.subr.mxu0 0.0
    %711 = vmatpush1.msra.mxu0 0.0
    %712 = vmatprep.subr.mxu0 0.0
    %713 = vmatpush1.msra.mxu0 0.0
    %714 = vmatprep.subr.mxu0 0.0
    %715 = vmatpush1.msra.mxu0 0.0
    %716 = vmatprep.subr.mxu0 0.0
    %717 = vmatpush1.msra.mxu0 0.0
    %718 = vmatprep.subr.mxu0 0.0
    %719 = vmatpush1.msra.mxu0 0.0
    %720 = vmatprep.subr.mxu0 0.0
    %721 = vmatpush1.msra.mxu0 0.0
    %722 = vmatprep.subr.mxu0 0.0
    %723 = vmatpush1.msra.mxu0 0.0
    %724 = vmatprep.subr.mxu0 0.0
    %725 = vmatpush1.msra.mxu0 0.0
    %726 = vmatprep.subr.mxu0 0.0
    %727 = vmatpush1.msra.mxu0 0.0
    %728 = vmatprep.subr.mxu0 0.0
    %729 = vmatpush1.msra.mxu0 0.0
    %730 = vmatprep.subr.mxu0 0.0
    %731 = vmatpush1.msra.mxu0 0.0
    %732 = vmatprep.subr.mxu0 0.0
    %733 = vmatpush1.msra.mxu0 0.0
    %734 = vmatprep.subr.mxu0 0.0
    %735 = vmatpush1.msra.mxu0 0.0
    %736 = vmatprep.subr.mxu0 0.0
    %737 = vmatpush1.msra.mxu0 0.0
    %738 = vmatprep.subr.mxu0 0.0
    %739 = vmatpush1.msra.mxu0 0.0
    %740 = vmatprep.mubr.f32.mxu0 0.0
    %741 = vmatmul.mubr.f32.gmra.mrb[0].mxu0 %v674
    %v742 = vpop.f32.mrb[0].mxu0
    %v743 = vadd.f32 0.0, %v742
    %v744 = vpop.f32.mrb[0].mxu0
    %745 = vdwg.mxu0
    %746 = vrot.lane.b32.xlu0 %v83, 112
    %v747 = vpop.permute.xlu0 %746
    %748 = vrot.lane.b32.xlu0 %v87, 112
    %v749 = vpop.permute.xlu0 %748
    %v750 = vsel %vm93, %v747, 0
    %v752 = vsel %vm93, %v749, 0
    %754 = vmatprep.subr.mxu0 0.0
    %755 = vmatpush1.xpose.msra.mxu0 %v752
    %756 = vmatprep.subr.mxu0 0.0
    %757 = vmatpush1.xpose.msra.mxu0 0.0
    %758 = vmatprep.subr.mxu0 0.0
    %759 = vmatpush1.xpose.msra.mxu0 0.0
    %760 = vmatprep.subr.mxu0 0.0
    %761 = vmatpush1.xpose.msra.mxu0 0.0
    %762 = vmatprep.subr.mxu0 0.0
    %763 = vmatpush1.xpose.msra.mxu0 0.0
    %764 = vmatprep.subr.mxu0 0.0
    %765 = vmatpush1.xpose.msra.mxu0 0.0
    %766 = vmatprep.subr.mxu0 0.0
    %767 = vmatpush1.xpose.msra.mxu0 0.0
    %768 = vmatprep.subr.mxu0 0.0
    %769 = vmatpush1.xpose.msra.mxu0 0.0
    %770 = vmatprep.subr.mxu0 0.0
    %771 = vmatpush1.xpose.msra.mxu0 0.0
    %772 = vmatprep.subr.mxu0 0.0
    %773 = vmatpush1.xpose.msra.mxu0 0.0
    %774 = vmatprep.subr.mxu0 0.0
    %775 = vmatpush1.xpose.msra.mxu0 0.0
    %776 = vmatprep.subr.mxu0 0.0
    %777 = vmatpush1.xpose.msra.mxu0 0.0
    %778 = vmatprep.subr.mxu0 0.0
    %779 = vmatpush1.xpose.msra.mxu0 0.0
    %780 = vmatprep.subr.mxu0 0.0
    %781 = vmatpush1.xpose.msra.mxu0 0.0
    %782 = vmatprep.subr.mxu0 0.0
    %783 = vmatpush1.xpose.msra.mxu0 0.0
    %784 = vmatprep.subr.mxu0 0.0
    %785 = vmatpush1.xpose.msra.mxu0 0.0
    %786 = vmatprep.subr.mxu0 0.0
    %787 = vmatpush1.xpose.msra.mxu0 0.0
    %788 = vmatprep.subr.mxu0 0.0
    %789 = vmatpush1.xpose.msra.mxu0 0.0
    %790 = vmatprep.subr.mxu0 0.0
    %791 = vmatpush1.xpose.msra.mxu0 0.0
    %792 = vmatprep.subr.mxu0 0.0
    %793 = vmatpush1.xpose.msra.mxu0 0.0
    %794 = vmatprep.subr.mxu0 0.0
    %795 = vmatpush1.xpose.msra.mxu0 0.0
    %796 = vmatprep.subr.mxu0 0.0
    %797 = vmatpush1.xpose.msra.mxu0 0.0
    %798 = vmatprep.subr.mxu0 0.0
    %799 = vmatpush1.xpose.msra.mxu0 0.0
    %800 = vmatprep.subr.mxu0 0.0
    %801 = vmatpush1.xpose.msra.mxu0 0.0
    %802 = vmatprep.subr.mxu0 0.0
    %803 = vmatpush1.xpose.msra.mxu0 0.0
    %804 = vmatprep.subr.mxu0 0.0
    %805 = vmatpush1.xpose.msra.mxu0 0.0
    %806 = vmatprep.subr.mxu0 0.0
    %807 = vmatpush1.xpose.msra.mxu0 0.0
    %808 = vmatprep.subr.mxu0 0.0
    %809 = vmatpush1.xpose.msra.mxu0 0.0
    %810 = vmatprep.subr.mxu0 0.0
    %811 = vmatpush1.xpose.msra.mxu0 0.0
    %812 = vmatprep.subr.mxu0 0.0
    %813 = vmatpush1.xpose.msra.mxu0 0.0
    %814 = vmatprep.subr.mxu0 0.0
    %815 = vmatpush1.xpose.msra.mxu0 0.0
    %816 = vmatprep.subr.mxu0 0.0
    %817 = vmatpush1.xpose.msra.mxu0 0.0
    %818 = vmatprep.mubr.f32.mxu0 0.0
    %819 = vmatmul.mubr.f32.gmra.mrb[0].mxu0 %v750
    %v820 = vpop.f32.mrb[0].mxu0
    %v821 = vadd.f32 0.0, %v820
    %v822 = vpop.f32.mrb[0].mxu0
    %823 = vdwg.mxu0
    %824 = vrot.lane.b32.xlu0 %v84, 112
    %v825 = vpop.permute.xlu0 %824
    %826 = vrot.lane.b32.xlu0 %v88, 112
    %v827 = vpop.permute.xlu0 %826
    %v828 = vsel %vm93, %v825, 0
    %v830 = vsel %vm93, %v827, 0
    %832 = vmatprep.subr.mxu0 0.0
    %833 = vmatpush1.xpose.msra.mxu0 %v830
    %834 = vmatprep.subr.mxu0 0.0
    %835 = vmatpush1.xpose.msra.mxu0 0.0
    %836 = vmatprep.subr.mxu0 0.0
    %837 = vmatpush1.xpose.msra.mxu0 0.0
    %838 = vmatprep.subr.mxu0 0.0
    %839 = vmatpush1.xpose.msra.mxu0 0.0
    %840 = vmatprep.subr.mxu0 0.0
    %841 = vmatpush1.xpose.msra.mxu0 0.0
    %842 = vmatprep.subr.mxu0 0.0
    %843 = vmatpush1.xpose.msra.mxu0 0.0
    %844 = vmatprep.subr.mxu0 0.0
    %845 = vmatpush1.xpose.msra.mxu0 0.0
    %846 = vmatprep.subr.mxu0 0.0
    %847 = vmatpush1.xpose.msra.mxu0 0.0
    %848 = vmatprep.subr.mxu0 0.0
    %849 = vmatpush1.xpose.msra.mxu0 0.0
    %850 = vmatprep.subr.mxu0 0.0
    %851 = vmatpush1.xpose.msra.mxu0 0.0
    %852 = vmatprep.subr.mxu0 0.0
    %853 = vmatpush1.xpose.msra.mxu0 0.0
    %854 = vmatprep.subr.mxu0 0.0
    %855 = vmatpush1.xpose.msra.mxu0 0.0
    %856 = vmatprep.subr.mxu0 0.0
    %857 = vmatpush1.xpose.msra.mxu0 0.0
    %858 = vmatprep.subr.mxu0 0.0
    %859 = vmatpush1.xpose.msra.mxu0 0.0
    %860 = vmatprep.subr.mxu0 0.0
    %861 = vmatpush1.xpose.msra.mxu0 0.0
    %862 = vmatprep.subr.mxu0 0.0
    %863 = vmatpush1.xpose.msra.mxu0 0.0
    %864 = vmatprep.subr.mxu0 0.0
    %865 = vmatpush1.xpose.msra.mxu0 0.0
    %866 = vmatprep.subr.mxu0 0.0
    %867 = vmatpush1.xpose.msra.mxu0 0.0
    %868 = vmatprep.subr.mxu0 0.0
    %869 = vmatpush1.xpose.msra.mxu0 0.0
    %870 = vmatprep.subr.mxu0 0.0
    %871 = vmatpush1.xpose.msra.mxu0 0.0
    %872 = vmatprep.subr.mxu0 0.0
    %873 = vmatpush1.xpose.msra.mxu0 0.0
    %874 = vmatprep.subr.mxu0 0.0
    %875 = vmatpush1.xpose.msra.mxu0 0.0
    %876 = vmatprep.subr.mxu0 0.0
    %877 = vmatpush1.xpose.msra.mxu0 0.0
    %878 = vmatprep.subr.mxu0 0.0
    %879 = vmatpush1.xpose.msra.mxu0 0.0
    %880 = vmatprep.subr.mxu0 0.0
    %881 = vmatpush1.xpose.msra.mxu0 0.0
    %882 = vmatprep.subr.mxu0 0.0
    %883 = vmatpush1.xpose.msra.mxu0 0.0
    %884 = vmatprep.subr.mxu0 0.0
    %885 = vmatpush1.xpose.msra.mxu0 0.0
    %886 = vmatprep.subr.mxu0 0.0
    %887 = vmatpush1.xpose.msra.mxu0 0.0
    %888 = vmatprep.subr.mxu0 0.0
    %889 = vmatpush1.xpose.msra.mxu0 0.0
    %890 = vmatprep.subr.mxu0 0.0
    %891 = vmatpush1.xpose.msra.mxu0 0.0
    %892 = vmatprep.subr.mxu0 0.0
    %893 = vmatpush1.xpose.msra.mxu0 0.0
    %894 = vmatprep.subr.mxu0 0.0
    %895 = vmatpush1.xpose.msra.mxu0 0.0
    %896 = vmatprep.mubr.f32.mxu0 0.0
    %897 = vmatmul.mubr.f32.gmra.mrb[0].mxu0 %v828
    %v898 = vpop.f32.mrb[0].mxu0
    %v899 = vadd.f32 0.0, %v898
    %v900 = vpop.f32.mrb[0].mxu0
    %901 = vdwg.mxu0
    %v902 = vsel %vm93, %v821, -inf
    %903 = vmax.xlane.f32.xlu0 %v902
    %v904 = vpop.xlane.xlu0 %903
    %v905 = vsel %vm93, %v899, -inf
    %906 = vmax.xlane.f32.xlu0 %v905
    %v907 = vpop.xlane.xlu0 %906
    %v908 = vsub.f32 %v821, %v904
    %v909 = vsub.f32 %v899, %v907
    %v910 = vmul.f32 %v908, 1.442695
    %v911 = vpow.pop %v910
    %v912 = vmul.f32 %v909, 1.442695
    %v913 = vpow.pop %v912
    %v914 = vsel %vm93, %v911, 0.0
    %915 = vadd.xlane.f32.xlu0 %v914
    %v916 = vpop.xlane.xlu0 %915
    %v917 = vsel %vm93, %v913, 0.0
    %918 = vadd.xlane.f32.xlu0 %v917
    %v919 = vpop.xlane.xlu0 %918
    %v920 = vrcp.pop %v916
    %v921 = vmul.f32 %v911, %v920
    %v922 = vrcp.pop %v919
    %v923 = vmul.f32 %v913, %v922
    %924 = vrot.lane.b32.xlu0 %v91, 112
    %v925 = vpop.permute.xlu0 %924
    %v928 = vsel %vm93, %v921, 0
    %930 = vmatprep.subr.mxu0 0.0
    %931 = vmatpush1.msra.mxu0 %v925
    %932 = vmatprep.subr.mxu0 0.0
    %933 = vmatpush1.msra.mxu0 0.0
    %934 = vmatprep.subr.mxu0 0.0
    %935 = vmatpush1.msra.mxu0 0.0
    %936 = vmatprep.subr.mxu0 0.0
    %937 = vmatpush1.msra.mxu0 0.0
    %938 = vmatprep.subr.mxu0 0.0
    %939 = vmatpush1.msra.mxu0 0.0
    %940 = vmatprep.subr.mxu0 0.0
    %941 = vmatpush1.msra.mxu0 0.0
    %942 = vmatprep.subr.mxu0 0.0
    %943 = vmatpush1.msra.mxu0 0.0
    %944 = vmatprep.subr.mxu0 0.0
    %945 = vmatpush1.msra.mxu0 0.0
    %946 = vmatprep.subr.mxu0 0.0
    %947 = vmatpush1.msra.mxu0 0.0
    %948 = vmatprep.subr.mxu0 0.0
    %949 = vmatpush1.msra.mxu0 0.0
    %950 = vmatprep.subr.mxu0 0.0
    %951 = vmatpush1.msra.mxu0 0.0
    %952 = vmatprep.subr.mxu0 0.0
    %953 = vmatpush1.msra.mxu0 0.0
    %954 = vmatprep.subr.mxu0 0.0
    %955 = vmatpush1.msra.mxu0 0.0
    %956 = vmatprep.subr.mxu0 0.0
    %957 = vmatpush1.msra.mxu0 0.0
    %958 = vmatprep.subr.mxu0 0.0
    %959 = vmatpush1.msra.mxu0 0.0
    %960 = vmatprep.subr.mxu0 0.0
    %961 = vmatpush1.msra.mxu0 0.0
    %962 = vmatprep.subr.mxu0 0.0
    %963 = vmatpush1.msra.mxu0 0.0
    %964 = vmatprep.subr.mxu0 0.0
    %965 = vmatpush1.msra.mxu0 0.0
    %966 = vmatprep.subr.mxu0 0.0
    %967 = vmatpush1.msra.mxu0 0.0
    %968 = vmatprep.subr.mxu0 0.0
    %969 = vmatpush1.msra.mxu0 0.0
    %970 = vmatprep.subr.mxu0 0.0
    %971 = vmatpush1.msra.mxu0 0.0
    %972 = vmatprep.subr.mxu0 0.0
    %973 = vmatpush1.msra.mxu0 0.0
    %974 = vmatprep.subr.mxu0 0.0
    %975 = vmatpush1.msra.mxu0 0.0
    %976 = vmatprep.subr.mxu0 0.0
    %977 = vmatpush1.msra.mxu0 0.0
    %978 = vmatprep.subr.mxu0 0.0
    %979 = vmatpush1.msra.mxu0 0.0
    %980 = vmatprep.subr.mxu0 0.0
    %981 = vmatpush1.msra.mxu0 0.0
    %982 = vmatprep.subr.mxu0 0.0
    %983 = vmatpush1.msra.mxu0 0.0
    %984 = vmatprep.subr.mxu0 0.0
    %985 = vmatpush1.msra.mxu0 0.0
    %986 = vmatprep.subr.mxu0 0.0
    %987 = vmatpush1.msra.mxu0 0.0
    %988 = vmatprep.subr.mxu0 0.0
    %989 = vmatpush1.msra.mxu0 0.0
    %990 = vmatprep.subr.mxu0 0.0
    %991 = vmatpush1.msra.mxu0 0.0
    %992 = vmatprep.subr.mxu0 0.0
    %993 = vmatpush1.msra.mxu0 0.0
    %994 = vmatprep.mubr.f32.mxu0 0.0
    %995 = vmatmul.mubr.f32.gmra.mrb[0].mxu0 %v928
    %v996 = vpop.f32.mrb[0].mxu0
    %v997 = vadd.f32 0.0, %v996
    %v998 = vpop.f32.mrb[0].mxu0
    %999 = vdwg.mxu0
    %1000 = vrot.lane.b32.xlu0 %v92, 112
    %v1001 = vpop.permute.xlu0 %1000
    %v1004 = vsel %vm93, %v923, 0
    %1006 = vmatprep.subr.mxu0 0.0
    %1007 = vmatpush1.msra.mxu0 %v1001
    %1008 = vmatprep.subr.mxu0 0.0
    %1009 = vmatpush1.msra.mxu0 0.0
    %1010 = vmatprep.subr.mxu0 0.0
    %1011 = vmatpush1.msra.mxu0 0.0
    %1012 = vmatprep.subr.mxu0 0.0
    %1013 = vmatpush1.msra.mxu0 0.0
    %1014 = vmatprep.subr.mxu0 0.0
    %1015 = vmatpush1.msra.mxu0 0.0
    %1016 = vmatprep.subr.mxu0 0.0
    %1017 = vmatpush1.msra.mxu0 0.0
    %1018 = vmatprep.subr.mxu0 0.0
    %1019 = vmatpush1.msra.mxu0 0.0
    %1020 = vmatprep.subr.mxu0 0.0
    %1021 = vmatpush1.msra.mxu0 0.0
    %1022 = vmatprep.subr.mxu0 0.0
    %1023 = vmatpush1.msra.mxu0 0.0
    %1024 = vmatprep.subr.mxu0 0.0
    %1025 = vmatpush1.msra.mxu0 0.0
    %1026 = vmatprep.subr.mxu0 0.0
    %1027 = vmatpush1.msra.mxu0 0.0
    %1028 = vmatprep.subr.mxu0 0.0
    %1029 = vmatpush1.msra.mxu0 0.0
    %1030 = vmatprep.subr.mxu0 0.0
    %1031 = vmatpush1.msra.mxu0 0.0
    %1032 = vmatprep.subr.mxu0 0.0
    %1033 = vmatpush1.msra.mxu0 0.0
    %1034 = vmatprep.subr.mxu0 0.0
    %1035 = vmatpush1.msra.mxu0 0.0
    %1036 = vmatprep.subr.mxu0 0.0
    %1037 = vmatpush1.msra.mxu0 0.0
    %1038 = vmatprep.subr.mxu0 0.0
    %1039 = vmatpush1.msra.mxu0 0.0
    %1040 = vmatprep.subr.mxu0 0.0
    %1041 = vmatpush1.msra.mxu0 0.0
    %1042 = vmatprep.subr.mxu0 0.0
    %1043 = vmatpush1.msra.mxu0 0.0
    %1044 = vmatprep.subr.mxu0 0.0
    %1045 = vmatpush1.msra.mxu0 0.0
    %1046 = vmatprep.subr.mxu0 0.0
    %1047 = vmatpush1.msra.mxu0 0.0
    %1048 = vmatprep.subr.mxu0 0.0
    %1049 = vmatpush1.msra.mxu0 0.0
    %1050 = vmatprep.subr.mxu0 0.0
    %1051 = vmatpush1.msra.mxu0 0.0
    %1052 = vmatprep.subr.mxu0 0.0
    %1053 = vmatpush1.msra.mxu0 0.0
    %1054 = vmatprep.subr.mxu0 0.0
    %1055 = vmatpush1.msra.mxu0 0.0
    %1056 = vmatprep.subr.mxu0 0.0
    %1057 = vmatpush1.msra.mxu0 0.0
    %1058 = vmatprep.subr.mxu0 0.0
    %1059 = vmatpush1.msra.mxu0 0.0
    %1060 = vmatprep.subr.mxu0 0.0
    %1061 = vmatpush1.msra.mxu0 0.0
    %1062 = vmatprep.subr.mxu0 0.0
    %1063 = vmatpush1.msra.mxu0 0.0
    %1064 = vmatprep.subr.mxu0 0.0
    %1065 = vmatpush1.msra.mxu0 0.0
    %1066 = vmatprep.subr.mxu0 0.0
    %1067 = vmatpush1.msra.mxu0 0.0
    %1068 = vmatprep.subr.mxu0 0.0
    %1069 = vmatpush1.msra.mxu0 0.0
    %1070 = vmatprep.mubr.f32.mxu0 0.0
    %1071 = vmatmul.mubr.f32.gmra.mrb[0].mxu0 %v1004
    %v1072 = vpop.f32.mrb[0].mxu0
    %v1073 = vadd.f32 0.0, %v1072
    %v1074 = vpop.f32.mrb[0].mxu0
    %1075 = vdwg.mxu0
    %1076 = vrot.lane.b32.xlu0 %v83, 104
    %v1077 = vpop.permute.xlu0 %1076
    %1078 = vrot.lane.b32.xlu0 %v87, 104
    %v1079 = vpop.permute.xlu0 %1078
    %v1080 = vsel %vm93, %v1077, 0
    %v1082 = vsel %vm93, %v1079, 0
    %1084 = vmatprep.subr.mxu0 0.0
    %1085 = vmatpush1.xpose.msra.mxu0 %v1082
    %1086 = vmatprep.subr.mxu0 0.0
    %1087 = vmatpush1.xpose.msra.mxu0 0.0
    %1088 = vmatprep.subr.mxu0 0.0
    %1089 = vmatpush1.xpose.msra.mxu0 0.0
    %1090 = vmatprep.subr.mxu0 0.0
    %1091 = vmatpush1.xpose.msra.mxu0 0.0
    %1092 = vmatprep.subr.mxu0 0.0
    %1093 = vmatpush1.xpose.msra.mxu0 0.0
    %1094 = vmatprep.subr.mxu0 0.0
    %1095 = vmatpush1.xpose.msra.mxu0 0.0
    %1096 = vmatprep.subr.mxu0 0.0
    %1097 = vmatpush1.xpose.msra.mxu0 0.0
    %1098 = vmatprep.subr.mxu0 0.0
    %1099 = vmatpush1.xpose.msra.mxu0 0.0
    %1100 = vmatprep.subr.mxu0 0.0
    %1101 = vmatpush1.xpose.msra.mxu0 0.0
    %1102 = vmatprep.subr.mxu0 0.0
    %1103 = vmatpush1.xpose.msra.mxu0 0.0
    %1104 = vmatprep.subr.mxu0 0.0
    %1105 = vmatpush1.xpose.msra.mxu0 0.0
    %1106 = vmatprep.subr.mxu0 0.0
    %1107 = vmatpush1.xpose.msra.mxu0 0.0
    %1108 = vmatprep.subr.mxu0 0.0
    %1109 = vmatpush1.xpose.msra.mxu0 0.0
    %1110 = vmatprep.subr.mxu0 0.0
    %1111 = vmatpush1.xpose.msra.mxu0 0.0
    %1112 = vmatprep.subr.mxu0 0.0
    %1113 = vmatpush1.xpose.msra.mxu0 0.0
    %1114 = vmatprep.subr.mxu0 0.0
    %1115 = vmatpush1.xpose.msra.mxu0 0.0
    %1116 = vmatprep.subr.mxu0 0.0
    %1117 = vmatpush1.xpose.msra.mxu0 0.0
    %1118 = vmatprep.subr.mxu0 0.0
    %1119 = vmatpush1.xpose.msra.mxu0 0.0
    %1120 = vmatprep.subr.mxu0 0.0
    %1121 = vmatpush1.xpose.msra.mxu0 0.0
    %1122 = vmatprep.subr.mxu0 0.0
    %1123 = vmatpush1.xpose.msra.mxu0 0.0
    %1124 = vmatprep.subr.mxu0 0.0
    %1125 = vmatpush1.xpose.msra.mxu0 0.0
    %1126 = vmatprep.subr.mxu0 0.0
    %1127 = vmatpush1.xpose.msra.mxu0 0.0
    %1128 = vmatprep.subr.mxu0 0.0
    %1129 = vmatpush1.xpose.msra.mxu0 0.0
    %1130 = vmatprep.subr.mxu0 0.0
    %1131 = vmatpush1.xpose.msra.mxu0 0.0
    %1132 = vmatprep.subr.mxu0 0.0
    %1133 = vmatpush1.xpose.msra.mxu0 0.0
    %1134 = vmatprep.subr.mxu0 0.0
    %1135 = vmatpush1.xpose.msra.mxu0 0.0
    %1136 = vmatprep.subr.mxu0 0.0
    %1137 = vmatpush1.xpose.msra.mxu0 0.0
    %1138 = vmatprep.subr.mxu0 0.0
    %1139 = vmatpush1.xpose.msra.mxu0 0.0
    %1140 = vmatprep.subr.mxu0 0.0
    %1141 = vmatpush1.xpose.msra.mxu0 0.0
    %1142 = vmatprep.subr.mxu0 0.0
    %1143 = vmatpush1.xpose.msra.mxu0 0.0
    %1144 = vmatprep.subr.mxu0 0.0
    %1145 = vmatpush1.xpose.msra.mxu0 0.0
    %1146 = vmatprep.subr.mxu0 0.0
    %1147 = vmatpush1.xpose.msra.mxu0 0.0
    %1148 = vmatprep.mubr.f32.mxu0 0.0
    %1149 = vmatmul.mubr.f32.gmra.mrb[0].mxu0 %v1080
    %v1150 = vpop.f32.mrb[0].mxu0
    %v1151 = vadd.f32 0.0, %v1150
    %v1152 = vpop.f32.mrb[0].mxu0
    %1153 = vdwg.mxu0
    %1154 = vrot.lane.b32.xlu0 %v84, 104
    %v1155 = vpop.permute.xlu0 %1154
    %1156 = vrot.lane.b32.xlu0 %v88, 104
    %v1157 = vpop.permute.xlu0 %1156
    %v1158 = vsel %vm93, %v1155, 0
    %v1160 = vsel %vm93, %v1157, 0
    %1162 = vmatprep.subr.mxu0 0.0
    %1163 = vmatpush1.xpose.msra.mxu0 %v1160
    %1164 = vmatprep.subr.mxu0 0.0
    %1165 = vmatpush1.xpose.msra.mxu0 0.0
    %1166 = vmatprep.subr.mxu0 0.0
    %1167 = vmatpush1.xpose.msra.mxu0 0.0
    %1168 = vmatprep.subr.mxu0 0.0
    %1169 = vmatpush1.xpose.msra.mxu0 0.0
    %1170 = vmatprep.subr.mxu0 0.0
    %1171 = vmatpush1.xpose.msra.mxu0 0.0
    %1172 = vmatprep.subr.mxu0 0.0
    %1173 = vmatpush1.xpose.msra.mxu0 0.0
    %1174 = vmatprep.subr.mxu0 0.0
    %1175 = vmatpush1.xpose.msra.mxu0 0.0
    %1176 = vmatprep.subr.mxu0 0.0
    %1177 = vmatpush1.xpose.msra.mxu0 0.0
    %1178 = vmatprep.subr.mxu0 0.0
    %1179 = vmatpush1.xpose.msra.mxu0 0.0
    %1180 = vmatprep.subr.mxu0 0.0
    %1181 = vmatpush1.xpose.msra.mxu0 0.0
    %1182 = vmatprep.subr.mxu0 0.0
    %1183 = vmatpush1.xpose.msra.mxu0 0.0
    %1184 = vmatprep.subr.mxu0 0.0
    %1185 = vmatpush1.xpose.msra.mxu0 0.0
    %1186 = vmatprep.subr.mxu0 0.0
    %1187 = vmatpush1.xpose.msra.mxu0 0.0
    %1188 = vmatprep.subr.mxu0 0.0
    %1189 = vmatpush1.xpose.msra.mxu0 0.0
    %1190 = vmatprep.subr.mxu0 0.0
    %1191 = vmatpush1.xpose.msra.mxu0 0.0
    %1192 = vmatprep.subr.mxu0 0.0
    %1193 = vmatpush1.xpose.msra.mxu0 0.0
    %1194 = vmatprep.subr.mxu0 0.0
    %1195 = vmatpush1.xpose.msra.mxu0 0.0
    %1196 = vmatprep.subr.mxu0 0.0
    %1197 = vmatpush1.xpose.msra.mxu0 0.0
    %1198 = vmatprep.subr.mxu0 0.0
    %1199 = vmatpush1.xpose.msra.mxu0 0.0
    %1200 = vmatprep.subr.mxu0 0.0
    %1201 = vmatpush1.xpose.msra.mxu0 0.0
    %1202 = vmatprep.subr.mxu0 0.0
    %1203 = vmatpush1.xpose.msra.mxu0 0.0
    %1204 = vmatprep.subr.mxu0 0.0
    %1205 = vmatpush1.xpose.msra.mxu0 0.0
    %1206 = vmatprep.subr.mxu0 0.0
    %1207 = vmatpush1.xpose.msra.mxu0 0.0
    %1208 = vmatprep.subr.mxu0 0.0
    %1209 = vmatpush1.xpose.msra.mxu0 0.0
    %1210 = vmatprep.subr.mxu0 0.0
    %1211 = vmatpush1.xpose.msra.mxu0 0.0
    %1212 = vmatprep.subr.mxu0 0.0
    %1213 = vmatpush1.xpose.msra.mxu0 0.0
    %1214 = vmatprep.subr.mxu0 0.0
    %1215 = vmatpush1.xpose.msra.mxu0 0.0
    %1216 = vmatprep.subr.mxu0 0.0
    %1217 = vmatpush1.xpose.msra.mxu0 0.0
    %1218 = vmatprep.subr.mxu0 0.0
    %1219 = vmatpush1.xpose.msra.mxu0 0.0
    %1220 = vmatprep.subr.mxu0 0.0
    %1221 = vmatpush1.xpose.msra.mxu0 0.0
    %1222 = vmatprep.subr.mxu0 0.0
    %1223 = vmatpush1.xpose.msra.mxu0 0.0
    %1224 = vmatprep.subr.mxu0 0.0
    %1225 = vmatpush1.xpose.msra.mxu0 0.0
    %1226 = vmatprep.mubr.f32.mxu0 0.0
    %1227 = vmatmul.mubr.f32.gmra.mrb[0].mxu0 %v1158
    %v1228 = vpop.f32.mrb[0].mxu0
    %v1229 = vadd.f32 0.0, %v1228
    %v1230 = vpop.f32.mrb[0].mxu0
    %1231 = vdwg.mxu0
    %v1232 = vsel %vm93, %v1151, -inf
    %1233 = vmax.xlane.f32.xlu0 %v1232
    %v1234 = vpop.xlane.xlu0 %1233
    %v1235 = vsel %vm93, %v1229, -inf
    %1236 = vmax.xlane.f32.xlu0 %v1235
    %v1237 = vpop.xlane.xlu0 %1236
    %v1238 = vsub.f32 %v1151, %v1234
    %v1239 = vsub.f32 %v1229, %v1237
    %v1240 = vmul.f32 %v1238, 1.442695
    %v1241 = vpow.pop %v1240
    %v1242 = vmul.f32 %v1239, 1.442695
    %v1243 = vpow.pop %v1242
    %v1244 = vsel %vm93, %v1241, 0.0
    %1245 = vadd.xlane.f32.xlu0 %v1244
    %v1246 = vpop.xlane.xlu0 %1245
    %v1247 = vsel %vm93, %v1243, 0.0
    %1248 = vadd.xlane.f32.xlu0 %v1247
    %v1249 = vpop.xlane.xlu0 %1248
    %v1250 = vrcp.pop %v1246
    %v1251 = vmul.f32 %v1241, %v1250
    %v1252 = vrcp.pop %v1249
    %v1253 = vmul.f32 %v1243, %v1252
    %1254 = vrot.lane.b32.xlu0 %v91, 104
    %v1255 = vpop.permute.xlu0 %1254
    %v1258 = vsel %vm93, %v1251, 0
    %1260 = vmatprep.subr.mxu0 0.0
    %1261 = vmatpush1.msra.mxu0 %v1255
    %1262 = vmatprep.subr.mxu0 0.0
    %1263 = vmatpush1.msra.mxu0 0.0
    %1264 = vmatprep.subr.mxu0 0.0
    %1265 = vmatpush1.msra.mxu0 0.0
    %1266 = vmatprep.subr.mxu0 0.0
    %1267 = vmatpush1.msra.mxu0 0.0
    %1268 = vmatprep.subr.mxu0 0.0
    %1269 = vmatpush1.msra.mxu0 0.0
    %1270 = vmatprep.subr.mxu0 0.0
    %1271 = vmatpush1.msra.mxu0 0.0
    %1272 = vmatprep.subr.mxu0 0.0
    %1273 = vmatpush1.msra.mxu0 0.0
    %1274 = vmatprep.subr.mxu0 0.0
    %1275 = vmatpush1.msra.mxu0 0.0
    %1276 = vmatprep.subr.mxu0 0.0
    %1277 = vmatpush1.msra.mxu0 0.0
    %1278 = vmatprep.subr.mxu0 0.0
    %1279 = vmatpush1.msra.mxu0 0.0
    %1280 = vmatprep.subr.mxu0 0.0
    %1281 = vmatpush1.msra.mxu0 0.0
    %1282 = vmatprep.subr.mxu0 0.0
    %1283 = vmatpush1.msra.mxu0 0.0
    %1284 = vmatprep.subr.mxu0 0.0
    %1285 = vmatpush1.msra.mxu0 0.0
    %1286 = vmatprep.subr.mxu0 0.0
    %1287 = vmatpush1.msra.mxu0 0.0
    %1288 = vmatprep.subr.mxu0 0.0
    %1289 = vmatpush1.msra.mxu0 0.0
    %1290 = vmatprep.subr.mxu0 0.0
    %1291 = vmatpush1.msra.mxu0 0.0
    %1292 = vmatprep.subr.mxu0 0.0
    %1293 = vmatpush1.msra.mxu0 0.0
    %1294 = vmatprep.subr.mxu0 0.0
    %1295 = vmatpush1.msra.mxu0 0.0
    %1296 = vmatprep.subr.mxu0 0.0
    %1297 = vmatpush1.msra.mxu0 0.0
    %1298 = vmatprep.subr.mxu0 0.0
    %1299 = vmatpush1.msra.mxu0 0.0
    %1300 = vmatprep.subr.mxu0 0.0
    %1301 = vmatpush1.msra.mxu0 0.0
    %1302 = vmatprep.subr.mxu0 0.0
    %1303 = vmatpush1.msra.mxu0 0.0
    %1304 = vmatprep.subr.mxu0 0.0
    %1305 = vmatpush1.msra.mxu0 0.0
    %1306 = vmatprep.subr.mxu0 0.0
    %1307 = vmatpush1.msra.mxu0 0.0
    %1308 = vmatprep.subr.mxu0 0.0
    %1309 = vmatpush1.msra.mxu0 0.0
    %1310 = vmatprep.subr.mxu0 0.0
    %1311 = vmatpush1.msra.mxu0 0.0
    %1312 = vmatprep.subr.mxu0 0.0
    %1313 = vmatpush1.msra.mxu0 0.0
    %1314 = vmatprep.subr.mxu0 0.0
    %1315 = vmatpush1.msra.mxu0 0.0
    %1316 = vmatprep.subr.mxu0 0.0
    %1317 = vmatpush1.msra.mxu0 0.0
    %1318 = vmatprep.subr.mxu0 0.0
    %1319 = vmatpush1.msra.mxu0 0.0
    %1320 = vmatprep.subr.mxu0 0.0
    %1321 = vmatpush1.msra.mxu0 0.0
    %1322 = vmatprep.subr.mxu0 0.0
    %1323 = vmatpush1.msra.mxu0 0.0
    %1324 = vmatprep.mubr.f32.mxu0 0.0
    %1325 = vmatmul.mubr.f32.gmra.mrb[0].mxu0 %v1258
    %v1326 = vpop.f32.mrb[0].mxu0
    %v1327 = vadd.f32 0.0, %v1326
    %v1328 = vpop.f32.mrb[0].mxu0
    %1329 = vdwg.mxu0
    %1330 = vrot.lane.b32.xlu0 %v92, 104
    %v1331 = vpop.permute.xlu0 %1330
    %v1334 = vsel %vm93, %v1253, 0
    %1336 = vmatprep.subr.mxu0 0.0
    %1337 = vmatpush1.msra.mxu0 %v1331
    %1338 = vmatprep.subr.mxu0 0.0
    %1339 = vmatpush1.msra.mxu0 0.0
    %1340 = vmatprep.subr.mxu0 0.0
    %1341 = vmatpush1.msra.mxu0 0.0
    %1342 = vmatprep.subr.mxu0 0.0
    %1343 = vmatpush1.msra.mxu0 0.0
    %1344 = vmatprep.subr.mxu0 0.0
    %1345 = vmatpush1.msra.mxu0 0.0
    %1346 = vmatprep.subr.mxu0 0.0
    %1347 = vmatpush1.msra.mxu0 0.0
    %1348 = vmatprep.subr.mxu0 0.0
    %1349 = vmatpush1.msra.mxu0 0.0
    %1350 = vmatprep.subr.mxu0 0.0
    %1351 = vmatpush1.msra.mxu0 0.0
    %1352 = vmatprep.subr.mxu0 0.0
    %1353 = vmatpush1.msra.mxu0 0.0
    %1354 = vmatprep.subr.mxu0 0.0
    %1355 = vmatpush1.msra.mxu0 0.0
    %1356 = vmatprep.subr.mxu0 0.0
    %1357 = vmatpush1.msra.mxu0 0.0
    %1358 = vmatprep.subr.mxu0 0.0
    %1359 = vmatpush1.msra.mxu0 0.0
    %1360 = vmatprep.subr.mxu0 0.0
    %1361 = vmatpush1.msra.mxu0 0.0
    %1362 = vmatprep.subr.mxu0 0.0
    %1363 = vmatpush1.msra.mxu0 0.0
    %1364 = vmatprep.subr.mxu0 0.0
    %1365 = vmatpush1.msra.mxu0 0.0
    %1366 = vmatprep.subr.mxu0 0.0
    %1367 = vmatpush1.msra.mxu0 0.0
    %1368 = vmatprep.subr.mxu0 0.0
    %1369 = vmatpush1.msra.mxu0 0.0
    %1370 = vmatprep.subr.mxu0 0.0
    %1371 = vmatpush1.msra.mxu0 0.0
    %1372 = vmatprep.subr.mxu0 0.0
    %1373 = vmatpush1.msra.mxu0 0.0
    %1374 = vmatprep.subr.mxu0 0.0
    %1375 = vmatpush1.msra.mxu0 0.0
    %1376 = vmatprep.subr.mxu0 0.0
    %1377 = vmatpush1.msra.mxu0 0.0
    %1378 = vmatprep.subr.mxu0 0.0
    %1379 = vmatpush1.msra.mxu0 0.0
    %1380 = vmatprep.subr.mxu0 0.0
    %1381 = vmatpush1.msra.mxu0 0.0
    %1382 = vmatprep.subr.mxu0 0.0
    %1383 = vmatpush1.msra.mxu0 0.0
    %1384 = vmatprep.subr.mxu0 0.0
    %1385 = vmatpush1.msra.mxu0 0.0
    %1386 = vmatprep.subr.mxu0 0.0
    %1387 = vmatpush1.msra.mxu0 0.0
    %1388 = vmatprep.subr.mxu0 0.0
    %1389 = vmatpush1.msra.mxu0 0.0
    %1390 = vmatprep.subr.mxu0 0.0
    %1391 = vmatpush1.msra.mxu0 0.0
    %1392 = vmatprep.subr.mxu0 0.0
    %1393 = vmatpush1.msra.mxu0 0.0
    %1394 = vmatprep.subr.mxu0 0.0
    %1395 = vmatpush1.msra.mxu0 0.0
    %1396 = vmatprep.subr.mxu0 0.0
    %1397 = vmatpush1.msra.mxu0 0.0
    %1398 = vmatprep.subr.mxu0 0.0
    %1399 = vmatpush1.msra.mxu0 0.0
    %1400 = vmatprep.mubr.f32.mxu0 0.0
    %1401 = vmatmul.mubr.f32.gmra.mrb[0].mxu0 %v1334
    %v1402 = vpop.f32.mrb[0].mxu0
    %v1403 = vadd.f32 0.0, %v1402
    %v1404 = vpop.f32.mrb[0].mxu0
    %1405 = vdwg.mxu0
    %v1406 = vlaneseq
    %v1407 = vshrl.u32 %v1406, 7
    %v1408 = vlaneseq
    %v1409 = vand.u32 %v1408, 127
    %v1410 = vmul.u32 %v1407, 4
    %vm1411 = vcmp.eq.s32.totalorder %v1409, %v1410
    %v1412 = vsel %vm1411, 1, 0
    %v1413 = vcvt.s32.f32 %v1412
    %vm1414 = vcmask 261120
    %v1416 = vsel %vm1414, %v1413, 0
    %1418 = vmatprep.subr.mxu0 0.0
    %1419 = vmatpush1.msra.mxu0 %v338
    %1420 = vmatprep.subr.mxu0 0.0
    %1421 = vmatpush1.msra.mxu0 %v666
    %1422 = vmatprep.subr.mxu0 0.0
    %1423 = vmatpush1.msra.mxu0 %v997
    %1424 = vmatprep.subr.mxu0 0.0
    %1425 = vmatpush1.msra.mxu0 %v1327
    %1426 = vmatprep.subr.mxu0 0.0
    %1427 = vmatpush1.msra.mxu0 0.0
    %1428 = vmatprep.subr.mxu0 0.0
    %1429 = vmatpush1.msra.mxu0 0.0
    %1430 = vmatprep.subr.mxu0 0.0
    %1431 = vmatpush1.msra.mxu0 0.0
    %1432 = vmatprep.subr.mxu0 0.0
    %1433 = vmatpush1.msra.mxu0 0.0
    %1434 = vmatprep.subr.mxu0 0.0
    %1435 = vmatpush1.msra.mxu0 0.0
    %1436 = vmatprep.subr.mxu0 0.0
    %1437 = vmatpush1.msra.mxu0 0.0
    %1438 = vmatprep.subr.mxu0 0.0
    %1439 = vmatpush1.msra.mxu0 0.0
    %1440 = vmatprep.subr.mxu0 0.0
    %1441 = vmatpush1.msra.mxu0 0.0
    %1442 = vmatprep.subr.mxu0 0.0
    %1443 = vmatpush1.msra.mxu0 0.0
    %1444 = vmatprep.subr.mxu0 0.0
    %1445 = vmatpush1.msra.mxu0 0.0
    %1446 = vmatprep.subr.mxu0 0.0
    %1447 = vmatpush1.msra.mxu0 0.0
    %1448 = vmatprep.subr.mxu0 0.0
    %1449 = vmatpush1.msra.mxu0 0.0
    %1450 = vmatprep.subr.mxu0 0.0
    %1451 = vmatpush1.msra.mxu0 0.0
    %1452 = vmatprep.subr.mxu0 0.0
    %1453 = vmatpush1.msra.mxu0 0.0
    %1454 = vmatprep.subr.mxu0 0.0
    %1455 = vmatpush1.msra.mxu0 0.0
    %1456 = vmatprep.subr.mxu0 0.0
    %1457 = vmatpush1.msra.mxu0 0.0
    %1458 = vmatprep.subr.mxu0 0.0
    %1459 = vmatpush1.msra.mxu0 0.0
    %1460 = vmatprep.subr.mxu0 0.0
    %1461 = vmatpush1.msra.mxu0 0.0
    %1462 = vmatprep.subr.mxu0 0.0
    %1463 = vmatpush1.msra.mxu0 0.0
    %1464 = vmatprep.subr.mxu0 0.0
    %1465 = vmatpush1.msra.mxu0 0.0
    %1466 = vmatprep.subr.mxu0 0.0
    %1467 = vmatpush1.msra.mxu0 0.0
    %1468 = vmatprep.subr.mxu0 0.0
    %1469 = vmatpush1.msra.mxu0 0.0
    %1470 = vmatprep.subr.mxu0 0.0
    %1471 = vmatpush1.msra.mxu0 0.0
    %1472 = vmatprep.subr.mxu0 0.0
    %1473 = vmatpush1.msra.mxu0 0.0
    %1474 = vmatprep.subr.mxu0 0.0
    %1475 = vmatpush1.msra.mxu0 0.0
    %1476 = vmatprep.subr.mxu0 0.0
    %1477 = vmatpush1.msra.mxu0 0.0
    %1478 = vmatprep.subr.mxu0 0.0
    %1479 = vmatpush1.msra.mxu0 0.0
    %1480 = vmatprep.subr.mxu0 0.0
    %1481 = vmatpush1.msra.mxu0 0.0
    %1482 = vmatprep.mubr.f32.mxu0 0.0
    %1483 = vmatmul.mubr.f32.gmra.mrb[0].mxu0 %v1416
    %v1484 = vpop.f32.mrb[0].mxu0
    %v1485 = vadd.f32 0.0, %v1484
    %v1486 = vpop.f32.mrb[0].mxu0
    %1487 = vdwg.mxu0
    %1488 = vmatprep.subr.mxu0 0.0
    %1489 = vmatpush1.msra.mxu0 %v411
    %1490 = vmatprep.subr.mxu0 0.0
    %1491 = vmatpush1.msra.mxu0 %v743
    %1492 = vmatprep.subr.mxu0 0.0
    %1493 = vmatpush1.msra.mxu0 %v1073
    %1494 = vmatprep.subr.mxu0 0.0
    %1495 = vmatpush1.msra.mxu0 %v1403
    %1496 = vmatprep.subr.mxu0 0.0
    %1497 = vmatpush1.msra.mxu0 0.0
    %1498 = vmatprep.subr.mxu0 0.0
    %1499 = vmatpush1.msra.mxu0 0.0
    %1500 = vmatprep.subr.mxu0 0.0
    %1501 = vmatpush1.msra.mxu0 0.0
    %1502 = vmatprep.subr.mxu0 0.0
    %1503 = vmatpush1.msra.mxu0 0.0
    %1504 = vmatprep.subr.mxu0 0.0
    %1505 = vmatpush1.msra.mxu0 0.0
    %1506 = vmatprep.subr.mxu0 0.0
    %1507 = vmatpush1.msra.mxu0 0.0
    %1508 = vmatprep.subr.mxu0 0.0
    %1509 = vmatpush1.msra.mxu0 0.0
    %1510 = vmatprep.subr.mxu0 0.0
    %1511 = vmatpush1.msra.mxu0 0.0
    %1512 = vmatprep.subr.mxu0 0.0
    %1513 = vmatpush1.msra.mxu0 0.0
    %1514 = vmatprep.subr.mxu0 0.0
    %1515 = vmatpush1.msra.mxu0 0.0
    %1516 = vmatprep.subr.mxu0 0.0
    %1517 = vmatpush1.msra.mxu0 0.0
    %1518 = vmatprep.subr.mxu0 0.0
    %1519 = vmatpush1.msra.mxu0 0.0
    %1520 = vmatprep.subr.mxu0 0.0
    %1521 = vmatpush1.msra.mxu0 0.0
    %1522 = vmatprep.subr.mxu0 0.0
    %1523 = vmatpush1.msra.mxu0 0.0
    %1524 = vmatprep.subr.mxu0 0.0
    %1525 = vmatpush1.msra.mxu0 0.0
    %1526 = vmatprep.subr.mxu0 0.0
    %1527 = vmatpush1.msra.mxu0 0.0
    %1528 = vmatprep.subr.mxu0 0.0
    %1529 = vmatpush1.msra.mxu0 0.0
    %1530 = vmatprep.subr.mxu0 0.0
    %1531 = vmatpush1.msra.mxu0 0.0
    %1532 = vmatprep.subr.mxu0 0.0
    %1533 = vmatpush1.msra.mxu0 0.0
    %1534 = vmatprep.subr.mxu0 0.0
    %1535 = vmatpush1.msra.mxu0 0.0
    %1536 = vmatprep.subr.mxu0 0.0
    %1537 = vmatpush1.msra.mxu0 0.0
    %1538 = vmatprep.subr.mxu0 0.0
    %1539 = vmatpush1.msra.mxu0 0.0
    %1540 = vmatprep.subr.mxu0 0.0
    %1541 = vmatpush1.msra.mxu0 0.0
    %1542 = vmatprep.subr.mxu0 0.0
    %1543 = vmatpush1.msra.mxu0 0.0
    %1544 = vmatprep.subr.mxu0 0.0
    %1545 = vmatpush1.msra.mxu0 0.0
    %1546 = vmatprep.subr.mxu0 0.0
    %1547 = vmatpush1.msra.mxu0 0.0
    %1548 = vmatprep.subr.mxu0 0.0
    %1549 = vmatpush1.msra.mxu0 0.0
    %1550 = vmatprep.subr.mxu0 0.0
    %1551 = vmatpush1.msra.mxu0 0.0
    %1552 = vmatprep.mubr.f32.mxu0 0.0
    %1553 = vmatmul.mubr.f32.gmra.mrb[0].mxu0 %v1416
    %v1554 = vpop.f32.mrb[0].mxu0
    %v1555 = vadd.f32 0.0, %v1554
    %v1556 = vpop.f32.mrb[0].mxu0
    %1557 = vdwg.mxu0
    %v1558 = vadd.s32 %v1410, 1
    %vm1559 = vcmp.eq.s32.totalorder %v1409, %v1558
    %v1560 = vsel %vm1559, 1, 0
    %v1561 = vcvt.s32.f32 %v1560
    %v1563 = vsel %vm1414, %v1561, 0
    %1565 = vmatprep.subr.mxu0 0.0
    %1566 = vmatpush1.msra.mxu0 %v338
    %1567 = vmatprep.subr.mxu0 0.0
    %1568 = vmatpush1.msra.mxu0 %v666
    %1569 = vmatprep.subr.mxu0 0.0
    %1570 = vmatpush1.msra.mxu0 %v997
    %1571 = vmatprep.subr.mxu0 0.0
    %1572 = vmatpush1.msra.mxu0 %v1327
    %1573 = vmatprep.subr.mxu0 0.0
    %1574 = vmatpush1.msra.mxu0 0.0
    %1575 = vmatprep.subr.mxu0 0.0
    %1576 = vmatpush1.msra.mxu0 0.0
    %1577 = vmatprep.subr.mxu0 0.0
    %1578 = vmatpush1.msra.mxu0 0.0
    %1579 = vmatprep.subr.mxu0 0.0
    %1580 = vmatpush1.msra.mxu0 0.0
    %1581 = vmatprep.subr.mxu0 0.0
    %1582 = vmatpush1.msra.mxu0 0.0
    %1583 = vmatprep.subr.mxu0 0.0
    %1584 = vmatpush1.msra.mxu0 0.0
    %1585 = vmatprep.subr.mxu0 0.0
    %1586 = vmatpush1.msra.mxu0 0.0
    %1587 = vmatprep.subr.mxu0 0.0
    %1588 = vmatpush1.msra.mxu0 0.0
    %1589 = vmatprep.subr.mxu0 0.0
    %1590 = vmatpush1.msra.mxu0 0.0
    %1591 = vmatprep.subr.mxu0 0.0
    %1592 = vmatpush1.msra.mxu0 0.0
    %1593 = vmatprep.subr.mxu0 0.0
    %1594 = vmatpush1.msra.mxu0 0.0
    %1595 = vmatprep.subr.mxu0 0.0
    %1596 = vmatpush1.msra.mxu0 0.0
    %1597 = vmatprep.subr.mxu0 0.0
    %1598 = vmatpush1.msra.mxu0 0.0
    %1599 = vmatprep.subr.mxu0 0.0
    %1600 = vmatpush1.msra.mxu0 0.0
    %1601 = vmatprep.subr.mxu0 0.0
    %1602 = vmatpush1.msra.mxu0 0.0
    %1603 = vmatprep.subr.mxu0 0.0
    %1604 = vmatpush1.msra.mxu0 0.0
    %1605 = vmatprep.subr.mxu0 0.0
    %1606 = vmatpush1.msra.mxu0 0.0
    %1607 = vmatprep.subr.mxu0 0.0
    %1608 = vmatpush1.msra.mxu0 0.0
    %1609 = vmatprep.subr.mxu0 0.0
    %1610 = vmatpush1.msra.mxu0 0.0
    %1611 = vmatprep.subr.mxu0 0.0
    %1612 = vmatpush1.msra.mxu0 0.0
    %1613 = vmatprep.subr.mxu0 0.0
    %1614 = vmatpush1.msra.mxu0 0.0
    %1615 = vmatprep.subr.mxu0 0.0
    %1616 = vmatpush1.msra.mxu0 0.0
    %1617 = vmatprep.subr.mxu0 0.0
    %1618 = vmatpush1.msra.mxu0 0.0
    %1619 = vmatprep.subr.mxu0 0.0
    %1620 = vmatpush1.msra.mxu0 0.0
    %1621 = vmatprep.subr.mxu0 0.0
    %1622 = vmatpush1.msra.mxu0 0.0
    %1623 = vmatprep.subr.mxu0 0.0
    %1624 = vmatpush1.msra.mxu0 0.0
    %1625 = vmatprep.subr.mxu0 0.0
    %1626 = vmatpush1.msra.mxu0 0.0
    %1627 = vmatprep.subr.mxu0 0.0
    %1628 = vmatpush1.msra.mxu0 0.0
    %1629 = vmatprep.mubr.f32.mxu0 0.0
    %1630 = vmatmul.mubr.f32.gmra.mrb[0].mxu0 %v1563
    %v1631 = vpop.f32.mrb[0].mxu0
    %v1632 = vadd.f32 0.0, %v1631
    %v1633 = vpop.f32.mrb[0].mxu0
    %1634 = vdwg.mxu0
    %1635 = vmatprep.subr.mxu0 0.0
    %1636 = vmatpush1.msra.mxu0 %v411
    %1637 = vmatprep.subr.mxu0 0.0
    %1638 = vmatpush1.msra.mxu0 %v743
    %1639 = vmatprep.subr.mxu0 0.0
    %1640 = vmatpush1.msra.mxu0 %v1073
    %1641 = vmatprep.subr.mxu0 0.0
    %1642 = vmatpush1.msra.mxu0 %v1403
    %1643 = vmatprep.subr.mxu0 0.0
    %1644 = vmatpush1.msra.mxu0 0.0
    %1645 = vmatprep.subr.mxu0 0.0
    %1646 = vmatpush1.msra.mxu0 0.0
    %1647 = vmatprep.subr.mxu0 0.0
    %1648 = vmatpush1.msra.mxu0 0.0
    %1649 = vmatprep.subr.mxu0 0.0
    %1650 = vmatpush1.msra.mxu0 0.0
    %1651 = vmatprep.subr.mxu0 0.0
    %1652 = vmatpush1.msra.mxu0 0.0
    %1653 = vmatprep.subr.mxu0 0.0
    %1654 = vmatpush1.msra.mxu0 0.0
    %1655 = vmatprep.subr.mxu0 0.0
    %1656 = vmatpush1.msra.mxu0 0.0
    %1657 = vmatprep.subr.mxu0 0.0
    %1658 = vmatpush1.msra.mxu0 0.0
    %1659 = vmatprep.subr.mxu0 0.0
    %1660 = vmatpush1.msra.mxu0 0.0
    %1661 = vmatprep.subr.mxu0 0.0
    %1662 = vmatpush1.msra.mxu0 0.0
    %1663 = vmatprep.subr.mxu0 0.0
    %1664 = vmatpush1.msra.mxu0 0.0
    %1665 = vmatprep.subr.mxu0 0.0
    %1666 = vmatpush1.msra.mxu0 0.0
    %1667 = vmatprep.subr.mxu0 0.0
    %1668 = vmatpush1.msra.mxu0 0.0
    %1669 = vmatprep.subr.mxu0 0.0
    %1670 = vmatpush1.msra.mxu0 0.0
    %1671 = vmatprep.subr.mxu0 0.0
    %1672 = vmatpush1.msra.mxu0 0.0
    %1673 = vmatprep.subr.mxu0 0.0
    %1674 = vmatpush1.msra.mxu0 0.0
    %1675 = vmatprep.subr.mxu0 0.0
    %1676 = vmatpush1.msra.mxu0 0.0
    %1677 = vmatprep.subr.mxu0 0.0
    %1678 = vmatpush1.msra.mxu0 0.0
    %1679 = vmatprep.subr.mxu0 0.0
    %1680 = vmatpush1.msra.mxu0 0.0
    %1681 = vmatprep.subr.mxu0 0.0
    %1682 = vmatpush1.msra.mxu0 0.0
    %1683 = vmatprep.subr.mxu0 0.0
    %1684 = vmatpush1.msra.mxu0 0.0
    %1685 = vmatprep.subr.mxu0 0.0
    %1686 = vmatpush1.msra.mxu0 0.0
    %1687 = vmatprep.subr.mxu0 0.0
    %1688 = vmatpush1.msra.mxu0 0.0
    %1689 = vmatprep.subr.mxu0 0.0
    %1690 = vmatpush1.msra.mxu0 0.0
    %1691 = vmatprep.subr.mxu0 0.0
    %1692 = vmatpush1.msra.mxu0 0.0
    %1693 = vmatprep.subr.mxu0 0.0
    %1694 = vmatpush1.msra.mxu0 0.0
    %1695 = vmatprep.subr.mxu0 0.0
    %1696 = vmatpush1.msra.mxu0 0.0
    %1697 = vmatprep.subr.mxu0 0.0
    %1698 = vmatpush1.msra.mxu0 0.0
    %1699 = vmatprep.mubr.f32.mxu0 0.0
    %1700 = vmatmul.mubr.f32.gmra.mrb[0].mxu0 %v1563
    %v1701 = vpop.f32.mrb[0].mxu0
    %v1702 = vadd.f32 0.0, %v1701
    %v1703 = vpop.f32.mrb[0].mxu0
    %1704 = vdwg.mxu0
    %v1705 = vadd.s32 %v1410, 2
    %vm1706 = vcmp.eq.s32.totalorder %v1409, %v1705
    %v1707 = vsel %vm1706, 1, 0
    %v1708 = vcvt.s32.f32 %v1707
    %v1710 = vsel %vm1414, %v1708, 0
    %1712 = vmatprep.subr.mxu0 0.0
    %1713 = vmatpush1.msra.mxu0 %v338
    %1714 = vmatprep.subr.mxu0 0.0
    %1715 = vmatpush1.msra.mxu0 %v666
    %1716 = vmatprep.subr.mxu0 0.0
    %1717 = vmatpush1.msra.mxu0 %v997
    %1718 = vmatprep.subr.mxu0 0.0
    %1719 = vmatpush1.msra.mxu0 %v1327
    %1720 = vmatprep.subr.mxu0 0.0
    %1721 = vmatpush1.msra.mxu0 0.0
    %1722 = vmatprep.subr.mxu0 0.0
    %1723 = vmatpush1.msra.mxu0 0.0
    %1724 = vmatprep.subr.mxu0 0.0
    %1725 = vmatpush1.msra.mxu0 0.0
    %1726 = vmatprep.subr.mxu0 0.0
    %1727 = vmatpush1.msra.mxu0 0.0
    %1728 = vmatprep.subr.mxu0 0.0
    %1729 = vmatpush1.msra.mxu0 0.0
    %1730 = vmatprep.subr.mxu0 0.0
    %1731 = vmatpush1.msra.mxu0 0.0
    %1732 = vmatprep.subr.mxu0 0.0
    %1733 = vmatpush1.msra.mxu0 0.0
    %1734 = vmatprep.subr.mxu0 0.0
    %1735 = vmatpush1.msra.mxu0 0.0
    %1736 = vmatprep.subr.mxu0 0.0
    %1737 = vmatpush1.msra.mxu0 0.0
    %1738 = vmatprep.subr.mxu0 0.0
    %1739 = vmatpush1.msra.mxu0 0.0
    %1740 = vmatprep.subr.mxu0 0.0
    %1741 = vmatpush1.msra.mxu0 0.0
    %1742 = vmatprep.subr.mxu0 0.0
    %1743 = vmatpush1.msra.mxu0 0.0
    %1744 = vmatprep.subr.mxu0 0.0
    %1745 = vmatpush1.msra.mxu0 0.0
    %1746 = vmatprep.subr.mxu0 0.0
    %1747 = vmatpush1.msra.mxu0 0.0
    %1748 = vmatprep.subr.mxu0 0.0
    %1749 = vmatpush1.msra.mxu0 0.0
    %1750 = vmatprep.subr.mxu0 0.0
    %1751 = vmatpush1.msra.mxu0 0.0
    %1752 = vmatprep.subr.mxu0 0.0
    %1753 = vmatpush1.msra.mxu0 0.0
    %1754 = vmatprep.subr.mxu0 0.0
    %1755 = vmatpush1.msra.mxu0 0.0
    %1756 = vmatprep.subr.mxu0 0.0
    %1757 = vmatpush1.msra.mxu0 0.0
    %1758 = vmatprep.subr.mxu0 0.0
    %1759 = vmatpush1.msra.mxu0 0.0
    %1760 = vmatprep.subr.mxu0 0.0
    %1761 = vmatpush1.msra.mxu0 0.0
    %1762 = vmatprep.subr.mxu0 0.0
    %1763 = vmatpush1.msra.mxu0 0.0
    %1764 = vmatprep.subr.mxu0 0.0
    %1765 = vmatpush1.msra.mxu0 0.0
    %1766 = vmatprep.subr.mxu0 0.0
    %1767 = vmatpush1.msra.mxu0 0.0
    %1768 = vmatprep.subr.mxu0 0.0
    %1769 = vmatpush1.msra.mxu0 0.0
    %1770 = vmatprep.subr.mxu0 0.0
    %1771 = vmatpush1.msra.mxu0 0.0
    %1772 = vmatprep.subr.mxu0 0.0
    %1773 = vmatpush1.msra.mxu0 0.0
    %1774 = vmatprep.subr.mxu0 0.0
    %1775 = vmatpush1.msra.mxu0 0.0
    %1776 = vmatprep.mubr.f32.mxu0 0.0
    %1777 = vmatmul.mubr.f32.gmra.mrb[0].mxu0 %v1710
    %v1778 = vpop.f32.mrb[0].mxu0
    %v1779 = vadd.f32 0.0, %v1778
    %v1780 = vpop.f32.mrb[0].mxu0
    %1781 = vdwg.mxu0
    %1782 = vmatprep.subr.mxu0 0.0
    %1783 = vmatpush1.msra.mxu0 %v411
    %1784 = vmatprep.subr.mxu0 0.0
    %1785 = vmatpush1.msra.mxu0 %v743
    %1786 = vmatprep.subr.mxu0 0.0
    %1787 = vmatpush1.msra.mxu0 %v1073
    %1788 = vmatprep.subr.mxu0 0.0
    %1789 = vmatpush1.msra.mxu0 %v1403
    %1790 = vmatprep.subr.mxu0 0.0
    %1791 = vmatpush1.msra.mxu0 0.0
    %1792 = vmatprep.subr.mxu0 0.0
    %1793 = vmatpush1.msra.mxu0 0.0
    %1794 = vmatprep.subr.mxu0 0.0
    %1795 = vmatpush1.msra.mxu0 0.0
    %1796 = vmatprep.subr.mxu0 0.0
    %1797 = vmatpush1.msra.mxu0 0.0
    %1798 = vmatprep.subr.mxu0 0.0
    %1799 = vmatpush1.msra.mxu0 0.0
    %1800 = vmatprep.subr.mxu0 0.0
    %1801 = vmatpush1.msra.mxu0 0.0
    %1802 = vmatprep.subr.mxu0 0.0
    %1803 = vmatpush1.msra.mxu0 0.0
    %1804 = vmatprep.subr.mxu0 0.0
    %1805 = vmatpush1.msra.mxu0 0.0
    %1806 = vmatprep.subr.mxu0 0.0
    %1807 = vmatpush1.msra.mxu0 0.0
    %1808 = vmatprep.subr.mxu0 0.0
    %1809 = vmatpush1.msra.mxu0 0.0
    %1810 = vmatprep.subr.mxu0 0.0
    %1811 = vmatpush1.msra.mxu0 0.0
    %1812 = vmatprep.subr.mxu0 0.0
    %1813 = vmatpush1.msra.mxu0 0.0
    %1814 = vmatprep.subr.mxu0 0.0
    %1815 = vmatpush1.msra.mxu0 0.0
    %1816 = vmatprep.subr.mxu0 0.0
    %1817 = vmatpush1.msra.mxu0 0.0
    %1818 = vmatprep.subr.mxu0 0.0
    %1819 = vmatpush1.msra.mxu0 0.0
    %1820 = vmatprep.subr.mxu0 0.0
    %1821 = vmatpush1.msra.mxu0 0.0
    %1822 = vmatprep.subr.mxu0 0.0
    %1823 = vmatpush1.msra.mxu0 0.0
    %1824 = vmatprep.subr.mxu0 0.0
    %1825 = vmatpush1.msra.mxu0 0.0
    %1826 = vmatprep.subr.mxu0 0.0
    %1827 = vmatpush1.msra.mxu0 0.0
    %1828 = vmatprep.subr.mxu0 0.0
    %1829 = vmatpush1.msra.mxu0 0.0
    %1830 = vmatprep.subr.mxu0 0.0
    %1831 = vmatpush1.msra.mxu0 0.0
    %1832 = vmatprep.subr.mxu0 0.0
    %1833 = vmatpush1.msra.mxu0 0.0
    %1834 = vmatprep.subr.mxu0 0.0
    %1835 = vmatpush1.msra.mxu0 0.0
    %1836 = vmatprep.subr.mxu0 0.0
    %1837 = vmatpush1.msra.mxu0 0.0
    %1838 = vmatprep.subr.mxu0 0.0
    %1839 = vmatpush1.msra.mxu0 0.0
    %1840 = vmatprep.subr.mxu0 0.0
    %1841 = vmatpush1.msra.mxu0 0.0
    %1842 = vmatprep.subr.mxu0 0.0
    %1843 = vmatpush1.msra.mxu0 0.0
    %1844 = vmatprep.subr.mxu0 0.0
    %1845 = vmatpush1.msra.mxu0 0.0
    %1846 = vmatprep.mubr.f32.mxu0 0.0
    %1847 = vmatmul.mubr.f32.gmra.mrb[0].mxu0 %v1710
    %v1848 = vpop.f32.mrb[0].mxu0
    %v1849 = vadd.f32 0.0, %v1848
    %v1850 = vpop.f32.mrb[0].mxu0
    %1851 = vdwg.mxu0
    %v1852 = vadd.s32 %v1410, 3
    %vm1853 = vcmp.eq.s32.totalorder %v1409, %v1852
    %v1854 = vsel %vm1853, 1, 0
    %v1855 = vcvt.s32.f32 %v1854
    %v1857 = vsel %vm1414, %v1855, 0
    %1859 = vmatprep.subr.mxu0 0.0
    %1860 = vmatpush1.msra.mxu0 %v338
    %1861 = vmatprep.subr.mxu0 0.0
    %1862 = vmatpush1.msra.mxu0 %v666
    %1863 = vmatprep.subr.mxu0 0.0
    %1864 = vmatpush1.msra.mxu0 %v997
    %1865 = vmatprep.subr.mxu0 0.0
    %1866 = vmatpush1.msra.mxu0 %v1327
    %1867 = vmatprep.subr.mxu0 0.0
    %1868 = vmatpush1.msra.mxu0 0.0
    %1869 = vmatprep.subr.mxu0 0.0
    %1870 = vmatpush1.msra.mxu0 0.0
    %1871 = vmatprep.subr.mxu0 0.0
    %1872 = vmatpush1.msra.mxu0 0.0
    %1873 = vmatprep.subr.mxu0 0.0
    %1874 = vmatpush1.msra.mxu0 0.0
    %1875 = vmatprep.subr.mxu0 0.0
    %1876 = vmatpush1.msra.mxu0 0.0
    %1877 = vmatprep.subr.mxu0 0.0
    %1878 = vmatpush1.msra.mxu0 0.0
    %1879 = vmatprep.subr.mxu0 0.0
    %1880 = vmatpush1.msra.mxu0 0.0
    %1881 = vmatprep.subr.mxu0 0.0
    %1882 = vmatpush1.msra.mxu0 0.0
    %1883 = vmatprep.subr.mxu0 0.0
    %1884 = vmatpush1.msra.mxu0 0.0
    %1885 = vmatprep.subr.mxu0 0.0
    %1886 = vmatpush1.msra.mxu0 0.0
    %1887 = vmatprep.subr.mxu0 0.0
    %1888 = vmatpush1.msra.mxu0 0.0
    %1889 = vmatprep.subr.mxu0 0.0
    %1890 = vmatpush1.msra.mxu0 0.0
    %1891 = vmatprep.subr.mxu0 0.0
    %1892 = vmatpush1.msra.mxu0 0.0
    %1893 = vmatprep.subr.mxu0 0.0
    %1894 = vmatpush1.msra.mxu0 0.0
    %1895 = vmatprep.subr.mxu0 0.0
    %1896 = vmatpush1.msra.mxu0 0.0
    %1897 = vmatprep.subr.mxu0 0.0
    %1898 = vmatpush1.msra.mxu0 0.0
    %1899 = vmatprep.subr.mxu0 0.0
    %1900 = vmatpush1.msra.mxu0 0.0
    %1901 = vmatprep.subr.mxu0 0.0
    %1902 = vmatpush1.msra.mxu0 0.0
    %1903 = vmatprep.subr.mxu0 0.0
    %1904 = vmatpush1.msra.mxu0 0.0
    %1905 = vmatprep.subr.mxu0 0.0
    %1906 = vmatpush1.msra.mxu0 0.0
    %1907 = vmatprep.subr.mxu0 0.0
    %1908 = vmatpush1.msra.mxu0 0.0
    %1909 = vmatprep.subr.mxu0 0.0
    %1910 = vmatpush1.msra.mxu0 0.0
    %1911 = vmatprep.subr.mxu0 0.0
    %1912 = vmatpush1.msra.mxu0 0.0
    %1913 = vmatprep.subr.mxu0 0.0
    %1914 = vmatpush1.msra.mxu0 0.0
    %1915 = vmatprep.subr.mxu0 0.0
    %1916 = vmatpush1.msra.mxu0 0.0
    %1917 = vmatprep.subr.mxu0 0.0
    %1918 = vmatpush1.msra.mxu0 0.0
    %1919 = vmatprep.subr.mxu0 0.0
    %1920 = vmatpush1.msra.mxu0 0.0
    %1921 = vmatprep.subr.mxu0 0.0
    %1922 = vmatpush1.msra.mxu0 0.0
    %1923 = vmatprep.mubr.f32.mxu0 0.0
    %1924 = vmatmul.mubr.f32.gmra.mrb[0].mxu0 %v1857
    %v1925 = vpop.f32.mrb[0].mxu0
    %v1926 = vadd.f32 0.0, %v1925
    %v1927 = vpop.f32.mrb[0].mxu0
    %1928 = vdwg.mxu0
    %1929 = vmatprep.subr.mxu0 0.0
    %1930 = vmatpush1.msra.mxu0 %v411
    %1931 = vmatprep.subr.mxu0 0.0
    %1932 = vmatpush1.msra.mxu0 %v743
    %1933 = vmatprep.subr.mxu0 0.0
    %1934 = vmatpush1.msra.mxu0 %v1073
    %1935 = vmatprep.subr.mxu0 0.0
    %1936 = vmatpush1.msra.mxu0 %v1403
    %1937 = vmatprep.subr.mxu0 0.0
    %1938 = vmatpush1.msra.mxu0 0.0
    %1939 = vmatprep.subr.mxu0 0.0
    %1940 = vmatpush1.msra.mxu0 0.0
    %1941 = vmatprep.subr.mxu0 0.0
    %1942 = vmatpush1.msra.mxu0 0.0
    %1943 = vmatprep.subr.mxu0 0.0
    %1944 = vmatpush1.msra.mxu0 0.0
    %1945 = vmatprep.subr.mxu0 0.0
    %1946 = vmatpush1.msra.mxu0 0.0
    %1947 = vmatprep.subr.mxu0 0.0
    %1948 = vmatpush1.msra.mxu0 0.0
    %1949 = vmatprep.subr.mxu0 0.0
    %1950 = vmatpush1.msra.mxu0 0.0
    %1951 = vmatprep.subr.mxu0 0.0
    %1952 = vmatpush1.msra.mxu0 0.0
    %1953 = vmatprep.subr.mxu0 0.0
    %1954 = vmatpush1.msra.mxu0 0.0
    %1955 = vmatprep.subr.mxu0 0.0
    %1956 = vmatpush1.msra.mxu0 0.0
    %1957 = vmatprep.subr.mxu0 0.0
    %1958 = vmatpush1.msra.mxu0 0.0
    %1959 = vmatprep.subr.mxu0 0.0
    %1960 = vmatpush1.msra.mxu0 0.0
    %1961 = vmatprep.subr.mxu0 0.0
    %1962 = vmatpush1.msra.mxu0 0.0
    %1963 = vmatprep.subr.mxu0 0.0
    %1964 = vmatpush1.msra.mxu0 0.0
    %1965 = vmatprep.subr.mxu0 0.0
    %1966 = vmatpush1.msra.mxu0 0.0
    %1967 = vmatprep.subr.mxu0 0.0
    %1968 = vmatpush1.msra.mxu0 0.0
    %1969 = vmatprep.subr.mxu0 0.0
    %1970 = vmatpush1.msra.mxu0 0.0
    %1971 = vmatprep.subr.mxu0 0.0
    %1972 = vmatpush1.msra.mxu0 0.0
    %1973 = vmatprep.subr.mxu0 0.0
    %1974 = vmatpush1.msra.mxu0 0.0
    %1975 = vmatprep.subr.mxu0 0.0
    %1976 = vmatpush1.msra.mxu0 0.0
    %1977 = vmatprep.subr.mxu0 0.0
    %1978 = vmatpush1.msra.mxu0 0.0
    %1979 = vmatprep.subr.mxu0 0.0
    %1980 = vmatpush1.msra.mxu0 0.0
    %1981 = vmatprep.subr.mxu0 0.0
    %1982 = vmatpush1.msra.mxu0 0.0
    %1983 = vmatprep.subr.mxu0 0.0
    %1984 = vmatpush1.msra.mxu0 0.0
    %1985 = vmatprep.subr.mxu0 0.0
    %1986 = vmatpush1.msra.mxu0 0.0
    %1987 = vmatprep.subr.mxu0 0.0
    %1988 = vmatpush1.msra.mxu0 0.0
    %1989 = vmatprep.subr.mxu0 0.0
    %1990 = vmatpush1.msra.mxu0 0.0
    %1991 = vmatprep.subr.mxu0 0.0
    %1992 = vmatpush1.msra.mxu0 0.0
    %1993 = vmatprep.mubr.f32.mxu0 0.0
    %1994 = vmatmul.mubr.f32.gmra.mrb[0].mxu0 %v1857
    %v1995 = vpop.f32.mrb[0].mxu0
    %v1996 = vadd.f32 0.0, %v1995
    %v1997 = vpop.f32.mrb[0].mxu0
    %1998 = vdwg.mxu0
    %2001 = vrot.lane.b32.xlu0 %v1632, 8
    %v2002 = vpop.permute.xlu0 %2001
    %2003 = vrot.lane.b32.xlu0 %v1702, 8
    %v2004 = vpop.permute.xlu0 %2003
    %2009 = vrot.lane.b32.xlu0 %v1779, 16
    %v2010 = vpop.permute.xlu0 %2009
    %2011 = vrot.lane.b32.xlu0 %v1849, 16
    %v2012 = vpop.permute.xlu0 %2011
    %2017 = vrot.lane.b32.xlu0 %v1926, 24
    %v2018 = vpop.permute.xlu0 %2017
    %2019 = vrot.lane.b32.xlu0 %v1996, 24
    %v2020 = vpop.permute.xlu0 %2019
    %v2023 = vsel %vm93, %v1485, %v2002
    %v2024 = vsel %vm93, %v1555, %v2004
    %vm2025 = vcmask 130048
    %v2026 = vsel %vm2025, %v2023, %v2010
    %v2027 = vsel %vm2025, %v2024, %v2012
    %vm2028 = vcmask 195584
    %v2029 = vsel %vm2028, %v2026, %v2018
    %v2030 = vsel %vm2028, %v2027, %v2020
    %v2031 = vld [vmem:[#allocation8] sm:$0xff]
    %v2032 = vld [vmem:[#allocation8 + $0x8] sm:$0xff]
    %v2033 = vld [vmem:[#allocation8 + $0x10] sm:$0xff]
    %v2034 = vld [vmem:[#allocation8 + $0x18] sm:$0xff]
    %v2035 = vld [vmem:[%s4] sm:$0x1]
    %v2037 = vlaneseq
    %v2038 = vshrl.u32 %v2037, 7
    %v2039 = vsub.s32 0, %v2038
    %v2040 = vrot.slane %v2035, %v2039
    %v2043 = vsel %vm1414, %v2029, 0
    %v2046 = vsel %vm1414, %v2030, 0
    %2048 = vmatprep.subr.mxu0 0.0
    %2049 = vmatpush1.msra.mxu0 %v2031
    %2050 = vmatprep.subr.mxu0 0.0
    %2051 = vmatpush1.msra.mxu0 %v2032
    %2052 = vmatprep.subr.mxu0 0.0
    %2053 = vmatpush1.msra.mxu0 %v2033
    %2054 = vmatprep.subr.mxu0 0.0
    %2055 = vmatpush1.msra.mxu0 %v2034
    %2056 = vmatprep.subr.mxu0 0.0
    %2057 = vmatpush1.msra.mxu0 0.0
    %2058 = vmatprep.subr.mxu0 0.0
    %2059 = vmatpush1.msra.mxu0 0.0
    %2060 = vmatprep.subr.mxu0 0.0
    %2061 = vmatpush1.msra.mxu0 0.0
    %2062 = vmatprep.subr.mxu0 0.0
    %2063 = vmatpush1.msra.mxu0 0.0
    %2064 = vmatprep.subr.mxu0 0.0
    %2065 = vmatpush1.msra.mxu0 0.0
    %2066 = vmatprep.subr.mxu0 0.0
    %2067 = vmatpush1.msra.mxu0 0.0
    %2068 = vmatprep.subr.mxu0 0.0
    %2069 = vmatpush1.msra.mxu0 0.0
    %2070 = vmatprep.subr.mxu0 0.0
    %2071 = vmatpush1.msra.mxu0 0.0
    %2072 = vmatprep.subr.mxu0 0.0
    %2073 = vmatpush1.msra.mxu0 0.0
    %2074 = vmatprep.subr.mxu0 0.0
    %2075 = vmatpush1.msra.mxu0 0.0
    %2076 = vmatprep.subr.mxu0 0.0
    %2077 = vmatpush1.msra.mxu0 0.0
    %2078 = vmatprep.subr.mxu0 0.0
    %2079 = vmatpush1.msra.mxu0 0.0
    %2080 = vmatprep.subr.mxu0 0.0
    %2081 = vmatpush1.msra.mxu0 0.0
    %2082 = vmatprep.subr.mxu0 0.0
    %2083 = vmatpush1.msra.mxu0 0.0
    %2084 = vmatprep.subr.mxu0 0.0
    %2085 = vmatpush1.msra.mxu0 0.0
    %2086 = vmatprep.subr.mxu0 0.0
    %2087 = vmatpush1.msra.mxu0 0.0
    %2088 = vmatprep.subr.mxu0 0.0
    %2089 = vmatpush1.msra.mxu0 0.0
    %2090 = vmatprep.subr.mxu0 0.0
    %2091 = vmatpush1.msra.mxu0 0.0
    %2092 = vmatprep.subr.mxu0 0.0
    %2093 = vmatpush1.msra.mxu0 0.0
    %2094 = vmatprep.subr.mxu0 0.0
    %2095 = vmatpush1.msra.mxu0 0.0
    %2096 = vmatprep.subr.mxu0 0.0
    %2097 = vmatpush1.msra.mxu0 0.0
    %2098 = vmatprep.subr.mxu0 0.0
    %2099 = vmatpush1.msra.mxu0 0.0
    %2100 = vmatprep.subr.mxu0 0.0
    %2101 = vmatpush1.msra.mxu0 0.0
    %2102 = vmatprep.subr.mxu0 0.0
    %2103 = vmatpush1.msra.mxu0 0.0
    %2104 = vmatprep.subr.mxu0 0.0
    %2105 = vmatpush1.msra.mxu0 0.0
    %2106 = vmatprep.subr.mxu0 0.0
    %2107 = vmatpush1.msra.mxu0 0.0
    %2108 = vmatprep.subr.mxu0 0.0
    %2109 = vmatpush1.msra.mxu0 0.0
    %2110 = vmatprep.subr.mxu0 0.0
    %2111 = vmatpush1.msra.mxu0 0.0
    %2112 = vmatprep.mubr.f32.mxu0 0.0
    %2113 = vmatmul.mubr.f32.gmra.mrb[0].mxu0 %v2043
    %v2114 = vpop.f32.mrb[0].mxu0
    %v2115 = vadd.f32 %v2040, %v2114
    %v2116 = vpop.f32.mrb[0].mxu0
    %2117 = vmatprep.mubr.f32.mxu0 0.0
    %2118 = vmatmul.mubr.f32.gmra.mrb[0].mxu0 %v2046
    %v2119 = vpop.f32.mrb[0].mxu0
    %v2120 = vadd.f32 %v2040, %v2119
    %v2121 = vpop.f32.mrb[0].mxu0
    %2122 = vdwg.mxu0
    %v2123 = vmax.f32 %v2115, 0.0
    %v2124 = vmax.f32 %v2120, 0.0
    %v2125 = vld [vmem:[%s5] sm:$0x3]
    %v2126 = vld [vmem:[%s5 + $0x2] sm:$0x3]
    %v2127 = vunpack.c.0.s8 %v2125
    %v2128 = vunpack.c.0.s8 %v2126
    %v2129 = vcvt.s32.f32 %v2127
    %v2130 = vcvt.s32.f32 %v2128
    %v2131 = vmul.f32 %v2129, 1.1111112
    %v2132 = vmul.f32 %v2130, 1.1111112
    %v2133 = vmul.f32 %v2123, %v2131
    %v2134 = vmul.f32 %v2124, %v2132
    %2135 = vst.msk [vmem:[#allocation10] sm:$0xff] %vm1414, %v2133
    %2136 = vst.msk [vmem:[#allocation10 + $0x8] sm:$0xff] %vm1414, %v2134
    // Predicated region
    $region42: #{tpu_custom_call.1} parent=1 // pred_check
      _
    $region43: #{tpu_custom_call.1} parent=1 // pred_check_branch
      %2138 = sbr.rel (0) target = $region45
    $region44: #{tpu_custom_call.1} parent=1 // pred_region
      %s2140 = ssub.s32 256, 256
      %2141 = vsyncadd [#allocation4], %s2140
      %s2142 = sshll.u32 [#allocation10], 4
      %s2143 = int_to_ptr.vmem [resolvable:$true] %s2142
      %2148 = dma.vmem_to_hbm [thread:$0]  %s2143, 256, %s6, [#allocation4], 128, 128, 8
    $region45: #{tpu_custom_call.1} parent=1 // pred_fallthru
      _
    // Predicated region
    $region46: #{tpu_custom_call.1} parent=1 // pred_check
      _
    $region47: #{tpu_custom_call.1} parent=1 // pred_check_branch
      %2150 = sbr.rel (0) target = $region49
    $region48: #{tpu_custom_call.1} parent=1 // pred_region
      %2151 = dma.done [#allocation4], 256
    $region49: #{tpu_custom_call.1} parent=1 // pred_fallthru
      _
    %2152 = vsyncpa [#allocation3], 1
    %2153 = vsyncpa [#allocation6], 1
    %2154 = vsyncpa [#allocation9], 1
    %2155 = vsyncpa [#allocation4], 1

</llo_original>
